<compile_context>
chip_gen: v7x
topology: tpu7x:2x2x1
jax: 0.10.0
libtpu: 0.0.40
codegen_flags: <defaults>
</compile_context>

<pallas_src>
import jax
import jax.numpy as jnp
from jax.experimental import pallas as pl
from jax.experimental.pallas import tpu as pltpu  # noqa: F401  (kept for parity)

# Small, self-consistent model sizes.
NTOKEN = 64
NINP = 32
NHID = 32
NLAYERS = 2
SEQ = 8
BATCH = 2
LANE_PAD = 128   # decoder output padded to a full 128-lane (unmasked) store


# ----------------------------------------------------------------------------
# Single fused forward kernel: embedding -> wavefront LSTM x NLAYERS -> decoder.
# ----------------------------------------------------------------------------
def _fused_forward_kernel(*refs):
    (tok_ref, enc_w_ref, h0_ref, c0_ref,
     w_ih0_ref, w_hh0_ref, b0_ref) = refs[:7]
    layer_refs = refs[7:7 + 2 * (NLAYERS - 1)]          # (W_stacked_l, b_l) l>=1
    dec_w_ref, dec_b_ref, out_ref = refs[7 + 2 * (NLAYERS - 1):]

    TB = SEQ * BATCH
    H = NHID
    f32 = jnp.float32
    bf16 = jnp.bfloat16

    # Embedding gather fused as one-hot @ encoder weight (bf16 MXU, f32 acc).
    tok = tok_ref[...]                                             # (TB, 1) int32
    vocab_iota = jax.lax.broadcasted_iota(jnp.int32, (TB, NTOKEN), 1)
    onehot = (vocab_iota == tok).astype(bf16)                      # exact 0/1
    x = jnp.dot(onehot, enc_w_ref[...],
                preferred_element_type=f32)                        # (TB, NINP)
    # TODO(synk): nn.Dropout / LockedDropout are identity here (inference).

    # Layer-0 input projection hoisted out of the recurrence (one matmul).
    gates_x0 = jnp.dot(x.astype(bf16), w_ih0_ref[...],
                       preferred_element_type=f32) + b0_ref[...]   # (TB, 4H)

    # Load weights once; reuse across all unrolled steps.
    w_hh0 = w_hh0_ref[...]                                         # (H, 4H) bf16
    w_stk = [layer_refs[2 * i][...] for i in range(NLAYERS - 1)]   # (2H, 4H) bf16
    b_stk = [layer_refs[2 * i + 1][...] for i in range(NLAYERS - 1)]

    hs = [h0_ref[l] for l in range(NLAYERS)]                       # (B, H) f32
    cs = [c0_ref[l] for l in range(NLAYERS)]
    outs = [[None] * SEQ for _ in range(NLAYERS)]                  # register-carried

    # Wavefront over (layer, time): wave w -> layer l runs step t = w - l.
    # Steps inside a wave are mutually independent, so the serial chain is
    # SEQ + NLAYERS - 1 recurrent matmul latencies instead of SEQ * NLAYERS.
    for wv in range(SEQ + NLAYERS - 1):
        for l in range(NLAYERS):
            t = wv - l
            if not (0 <= t < SEQ):
                continue
            if l == 0:
                g = gates_x0[t * BATCH:(t + 1) * BATCH, :] + jnp.dot(
                    hs[0].astype(bf16), w_hh0, preferred_element_type=f32)
            else:
                # Folded input+recurrent projection: [x_t, h_l] @ [W_ih; W_hh].
                xin = jnp.concatenate([outs[l - 1][t], hs[l]],
                                      axis=1).astype(bf16)         # (B, 2H)
                g = jnp.dot(xin, w_stk[l - 1],
                            preferred_element_type=f32) + b_stk[l - 1]
            # Consolidated activations: one sigmoid + one tanh over (B, 4H),
            # then slice i/f/o from sigmoid and g from tanh.
            sg = jax.nn.sigmoid(g)
            tg = jnp.tanh(g)
            c_new = sg[:, H:2 * H] * cs[l] + sg[:, 0:H] * tg[:, 2 * H:3 * H]
            h_new = sg[:, 3 * H:4 * H] * jnp.tanh(c_new)
            hs[l] = h_new
            cs[l] = c_new
            outs[l][t] = h_new                                     # stays in vregs

    # Decoder: concatenate the register-carried last-layer outputs once, then a
    # single lane-dense (TB, 128) store of the padded logits.
    y = jnp.concatenate(outs[NLAYERS - 1], axis=0).astype(bf16)    # (TB, H)
    out_ref[...] = (jnp.dot(y, dec_w_ref[...], preferred_element_type=f32)
                    + dec_b_ref[...])


def rnn_model_forward(params, tokens, hidden):
    """tokens: (T, B) int32.  hidden: (h0, c0), each (NLAYERS, B, NHID)."""
    h0, c0 = hidden
    T, B = tokens.shape
    TB = T * B
    bf16 = jnp.bfloat16
    tok_flat = tokens.reshape(TB, 1).astype(jnp.int32)

    # Layer 0 keeps a hoisted input projection; layers >= 1 get the stacked
    # [W_ih; W_hh] (2H, 4H) weight for the folded per-step matmul.
    w_ih0, w_hh0, b0 = params["lstm"][0]
    args = [tok_flat,
            params["encoder_w"].astype(bf16),
            h0, c0,
            w_ih0.astype(bf16), w_hh0.astype(bf16), b0]
    for l in range(1, NLAYERS):
        w_ih, w_hh, b = params["lstm"][l]
        args += [jnp.concatenate([w_ih, w_hh], axis=0).astype(bf16), b]

    # Decoder padded to 128 output lanes (zeros) for an unmasked final store.
    dec_w = jnp.zeros((NHID, LANE_PAD), jnp.float32)
    dec_w = dec_w.at[:, :NTOKEN].set(params["decoder_w"]).astype(bf16)
    dec_b = jnp.zeros((1, LANE_PAD), jnp.float32)
    dec_b = dec_b.at[:, :NTOKEN].set(params["decoder_b"])
    args += [dec_w, dec_b]

    # Advisory cost estimate (keeps XLA's scheduler honest about the call).
    flops = 2 * (TB * NTOKEN * NINP            # one-hot embedding matmul
                 + TB * NINP * 4 * NHID        # layer-0 hoisted projection
                 + T * B * NHID * 4 * NHID     # layer-0 recurrent steps
                 + (NLAYERS - 1) * T * B * 2 * NHID * 4 * NHID  # folded steps
                 + TB * NHID * LANE_PAD)       # decoder
    transcendentals = NLAYERS * T * (2 * B * 4 * NHID + B * NHID)
    bytes_accessed = (sum(int(a.size) * a.dtype.itemsize for a in args)
                      + TB * LANE_PAD * 4)

    decoded_pad = pl.pallas_call(
        _fused_forward_kernel,
        out_shape=jax.ShapeDtypeStruct((TB, LANE_PAD), jnp.float32),
        cost_estimate=pl.CostEstimate(flops=flops,
                                      transcendentals=transcendentals,
                                      bytes_accessed=bytes_accessed),
    )(*args)

    decoded = decoded_pad[:, :NTOKEN].reshape(T, B, NTOKEN)
    # Like the PyTorch module's forward (it returns `hidden`, not new_hidden),
    # the original hidden state is returned unchanged.
    return decoded, hidden


# ----------------------------------------------------------------------------
# Parameter init (deterministic, mirrors PyTorch init semantics).
# ----------------------------------------------------------------------------
def init_params(key):
    n_keys = 2 + 4 * NLAYERS
    keys = list(jax.random.split(key, n_keys))
    initrange = 0.1

    params = {}
    params["encoder_w"] = jax.random.uniform(
        keys.pop(0), (NTOKEN, NINP), jnp.float32, -initrange, initrange)
    params["decoder_w"] = jax.random.uniform(
        keys.pop(0), (NHID, NTOKEN), jnp.float32, -initrange, initrange)
    params["decoder_b"] = jnp.zeros((NTOKEN,), jnp.float32)

    lstm = []
    for l in range(NLAYERS):
        in_dim = NINP if l == 0 else NHID
        k = 1.0 / jnp.sqrt(jnp.float32(NHID))
        w_ih = jax.random.uniform(keys.pop(0), (in_dim, 4 * NHID),
                                  jnp.float32, -k, k)
        w_hh = jax.random.uniform(keys.pop(0), (NHID, 4 * NHID),
                                  jnp.float32, -k, k)
        b_ih = jax.random.uniform(keys.pop(0), (4 * NHID,), jnp.float32, -k, k)
        b_hh = jax.random.uniform(keys.pop(0), (4 * NHID,), jnp.float32, -k, k)
        bias = (b_ih + b_hh).reshape(1, 4 * NHID)
        lstm.append((w_ih, w_hh, bias))
    params["lstm"] = lstm
    return params


def init_hidden(bsz):
    return (jnp.zeros((NLAYERS, bsz, NHID), jnp.float32),
            jnp.zeros((NLAYERS, bsz, NHID), jnp.float32))


# ----------------------------------------------------------------------------
# Pure-JAX references:
#   use_bf16=True  -> same bf16 MXU-operand casts as the kernel (structural check)
#   use_bf16=False -> full f32 HIGHEST precision (bounds bf16 quantization error)
# ----------------------------------------------------------------------------
def rnn_model_forward_ref(params, tokens, hidden, use_bf16):
    h0, c0 = hidden
    T, B = tokens.shape
    hp = jax.lax.Precision.HIGHEST

    def dot(a, b):
        if use_bf16:
            return jnp.dot(a.astype(jnp.bfloat16), b.astype(jnp.bfloat16),
                           preferred_element_type=jnp.float32)
        return jnp.dot(a, b, precision=hp)

    enc_w = params["encoder_w"]
    if use_bf16:
        enc_w = enc_w.astype(jnp.bfloat16).astype(jnp.float32)
    x = jnp.take(enc_w, tokens, axis=0)                            # (T, B, NINP)

    for l in range(NLAYERS):
        w_ih, w_hh, bias = params["lstm"][l]
        h, c = h0[l], c0[l]
        hs = []
        for t in range(T):
            g = dot(x[t], w_ih) + dot(h, w_hh) + bias
            i_g = jax.nn.sigmoid(g[:, 0:NHID])
            f_g = jax.nn.sigmoid(g[:, NHID:2 * NHID])
            g_g = jnp.tanh(g[:, 2 * NHID:3 * NHID])
            o_g = jax.nn.sigmoid(g[:, 3 * NHID:4 * NHID])
            c = f_g * c + i_g * g_g
            h = o_g * jnp.tanh(c)
            hs.append(h)
        x = jnp.stack(hs, axis=0)                                  # (T, B, H)
    dec = dot(x.reshape(T * B, NHID), params["decoder_w"]) + params["decoder_b"]
    return dec.reshape(T, B, NTOKEN)


if __name__ == "__main__":
    key = jax.random.PRNGKey(0)
    k_param, k_tok = jax.random.split(key)
    params = init_params(k_param)
    tokens = jax.random.randint(k_tok, (SEQ, BATCH), 0, NTOKEN, dtype=jnp.int32)
    hidden = init_hidden(BATCH)

    decoded, hidden_out = rnn_model_forward(params, tokens, hidden)
    decoded = jax.block_until_ready(decoded)

    assert decoded.shape == (SEQ, BATCH, NTOKEN)
    assert decoded.dtype == jnp.float32
    assert bool(jnp.all(jnp.isfinite(decoded)))

    # Structural check against a reference using the SAME bf16 MXU-operand
    # casts (catches any wavefront / weight-stacking / gate-order bug).
    ref_bf16 = rnn_model_forward_ref(params, tokens, hidden, use_bf16=True)
    err_bf16 = float(jnp.max(jnp.abs(decoded - ref_bf16)))
    assert bool(jnp.allclose(decoded, ref_bf16, atol=5e-3, rtol=5e-3)), err_bf16

    # Accuracy check against the full-f32 HIGHEST-precision reference; the gap
    # is only the bf16-input MXU quantization error.
    ref_f32 = rnn_model_forward_ref(params, tokens, hidden, use_bf16=False)
    err_f32 = float(jnp.max(jnp.abs(decoded - ref_f32)))
    assert bool(jnp.allclose(decoded, ref_f32, atol=2e-2, rtol=2e-2)), err_f32

    print("KERNEL_OK")
</pallas_src>

<mosaic_0001>
module attributes {stable_mosaic.version = 11 : i64} {
  func.func @_fused_forward_kernel(%arg0: memref<16x1xi32, #tpu.memory_space<vmem>>, %arg1: memref<64x32xbf16, #tpu.memory_space<vmem>>, %arg2: memref<2x2x32xf32, #tpu.memory_space<vmem>>, %arg3: memref<2x2x32xf32, #tpu.memory_space<vmem>>, %arg4: memref<32x128xbf16, #tpu.memory_space<vmem>>, %arg5: memref<32x128xbf16, #tpu.memory_space<vmem>>, %arg6: memref<1x128xf32, #tpu.memory_space<vmem>>, %arg7: memref<64x128xbf16, #tpu.memory_space<vmem>>, %arg8: memref<1x128xf32, #tpu.memory_space<vmem>>, %arg9: memref<32x128xbf16, #tpu.memory_space<vmem>>, %arg10: memref<1x128xf32, #tpu.memory_space<vmem>>, %arg11: memref<16x128xf32, #tpu.memory_space<vmem>>) attributes {dimension_semantics = [], scalar_prefetch = 0 : i64, scratch_operands = 0 : i64, tpu.core_type = #tpu.core_type<tc>} {
    %c0 = arith.constant 0 : index
    %c0_0 = arith.constant 0 : index
    %0 = vector.load %arg0[%c0, %c0_0] : memref<16x1xi32, #tpu.memory_space<vmem>>, vector<16x1xi32>
    %1 = tpu.iota {dimensions = array<i32: 1>} : vector<16x64xi32>
    %2 = vector.broadcast %0 : vector<16x1xi32> to vector<16x64xi32>
    %3 = arith.cmpi eq, %1, %2 : vector<16x64xi32>
    %4 = arith.extui %3 : vector<16x64xi1> to vector<16x64xi32>
    %5 = arith.sitofp %4 : vector<16x64xi32> to vector<16x64xf32>
    %6 = arith.truncf %5 : vector<16x64xf32> to vector<16x64xbf16>
    %c0_1 = arith.constant 0 : index
    %c0_2 = arith.constant 0 : index
    %7 = vector.load %arg1[%c0_1, %c0_2] : memref<64x32xbf16, #tpu.memory_space<vmem>>, vector<64x32xbf16>
    %cst = arith.constant dense<0.000000e+00> : vector<16x32xf32>
    %8 = tpu.matmul %6, %7, %cst {dimension_numbers = #tpu.dot_dimension_numbers<[1], [0], [0], [1], [0, 0, 1, 1], [], []>} : vector<16x64xbf16>, vector<64x32xbf16>, vector<16x32xf32> -> vector<16x32xf32>
    %9 = arith.truncf %8 : vector<16x32xf32> to vector<16x32xbf16>
    %c0_3 = arith.constant 0 : index
    %c0_4 = arith.constant 0 : index
    %10 = vector.load %arg4[%c0_3, %c0_4] : memref<32x128xbf16, #tpu.memory_space<vmem>>, vector<32x128xbf16>
    %cst_5 = arith.constant dense<0.000000e+00> : vector<16x128xf32>
    %11 = tpu.matmul %9, %10, %cst_5 {dimension_numbers = #tpu.dot_dimension_numbers<[1], [0], [0], [1], [0, 0, 1, 1], [], []>} : vector<16x32xbf16>, vector<32x128xbf16>, vector<16x128xf32> -> vector<16x128xf32>
    %c0_6 = arith.constant 0 : index
    %c0_7 = arith.constant 0 : index
    %12 = vector.load %arg6[%c0_6, %c0_7] : memref<1x128xf32, #tpu.memory_space<vmem>>, vector<1x128xf32>
    %13 = vector.broadcast %12 : vector<1x128xf32> to vector<16x128xf32>
    %14 = arith.addf %11, %13 : vector<16x128xf32>
    %c0_8 = arith.constant 0 : index
    %c0_9 = arith.constant 0 : index
    %15 = vector.load %arg5[%c0_8, %c0_9] : memref<32x128xbf16, #tpu.memory_space<vmem>>, vector<32x128xbf16>
    %c0_10 = arith.constant 0 : index
    %c0_11 = arith.constant 0 : index
    %16 = vector.load %arg7[%c0_10, %c0_11] : memref<64x128xbf16, #tpu.memory_space<vmem>>, vector<64x128xbf16>
    %c0_12 = arith.constant 0 : index
    %c0_13 = arith.constant 0 : index
    %17 = vector.load %arg8[%c0_12, %c0_13] : memref<1x128xf32, #tpu.memory_space<vmem>>, vector<1x128xf32>
    %c0_14 = arith.constant 0 : index
    %c0_15 = arith.constant 0 : index
    %c0_16 = arith.constant 0 : index
    %18 = vector.load %arg2[%c0_14, %c0_15, %c0_16] : memref<2x2x32xf32, #tpu.memory_space<vmem>>, vector<1x2x32xf32>
    %19 = vector.shape_cast %18 : vector<1x2x32xf32> to vector<2x32xf32>
    %c1 = arith.constant 1 : index
    %c0_17 = arith.constant 0 : index
    %c0_18 = arith.constant 0 : index
    %20 = vector.load %arg2[%c1, %c0_17, %c0_18] : memref<2x2x32xf32, #tpu.memory_space<vmem>>, vector<1x2x32xf32>
    %21 = vector.shape_cast %20 : vector<1x2x32xf32> to vector<2x32xf32>
    %c0_19 = arith.constant 0 : index
    %c0_20 = arith.constant 0 : index
    %c0_21 = arith.constant 0 : index
    %22 = vector.load %arg3[%c0_19, %c0_20, %c0_21] : memref<2x2x32xf32, #tpu.memory_space<vmem>>, vector<1x2x32xf32>
    %23 = vector.shape_cast %22 : vector<1x2x32xf32> to vector<2x32xf32>
    %c1_22 = arith.constant 1 : index
    %c0_23 = arith.constant 0 : index
    %c0_24 = arith.constant 0 : index
    %24 = vector.load %arg3[%c1_22, %c0_23, %c0_24] : memref<2x2x32xf32, #tpu.memory_space<vmem>>, vector<1x2x32xf32>
    %25 = vector.shape_cast %24 : vector<1x2x32xf32> to vector<2x32xf32>
    %26 = vector.extract_strided_slice %14 {offsets = [0, 0], sizes = [2, 128], strides = [1, 1]} : vector<16x128xf32> to vector<2x128xf32>
    %27 = arith.truncf %19 : vector<2x32xf32> to vector<2x32xbf16>
    %cst_25 = arith.constant dense<0.000000e+00> : vector<2x128xf32>
    %28 = tpu.matmul %27, %15, %cst_25 {dimension_numbers = #tpu.dot_dimension_numbers<[1], [0], [0], [1], [0, 0, 1, 1], [], []>} : vector<2x32xbf16>, vector<32x128xbf16>, vector<2x128xf32> -> vector<2x128xf32>
    %29 = arith.addf %26, %28 : vector<2x128xf32>
    %30 = arith.negf %29 : vector<2x128xf32>
    %31 = math.exp %30 : vector<2x128xf32>
    %cst_26 = arith.constant 1.000000e+00 : f32
    %32 = vector.broadcast %cst_26 : f32 to vector<2x128xf32>
    %33 = arith.addf %32, %31 : vector<2x128xf32>
    %34 = arith.divf %32, %33 : vector<2x128xf32>
    %35 = math.tanh %29 : vector<2x128xf32>
    %36 = vector.extract_strided_slice %34 {offsets = [0, 32], sizes = [2, 32], strides = [1, 1]} : vector<2x128xf32> to vector<2x32xf32>
    %37 = arith.mulf %36, %23 : vector<2x32xf32>
    %38 = vector.extract_strided_slice %34 {offsets = [0, 0], sizes = [2, 32], strides = [1, 1]} : vector<2x128xf32> to vector<2x32xf32>
    %39 = vector.extract_strided_slice %35 {offsets = [0, 64], sizes = [2, 32], strides = [1, 1]} : vector<2x128xf32> to vector<2x32xf32>
    %40 = arith.mulf %38, %39 : vector<2x32xf32>
    %41 = arith.addf %37, %40 : vector<2x32xf32>
    %42 = vector.extract_strided_slice %34 {offsets = [0, 96], sizes = [2, 32], strides = [1, 1]} : vector<2x128xf32> to vector<2x32xf32>
    %43 = math.tanh %41 : vector<2x32xf32>
    %44 = arith.mulf %42, %43 : vector<2x32xf32>
    %45 = vector.extract_strided_slice %14 {offsets = [2, 0], sizes = [2, 128], strides = [1, 1]} : vector<16x128xf32> to vector<2x128xf32>
    %46 = arith.truncf %44 : vector<2x32xf32> to vector<2x32xbf16>
    %cst_27 = arith.constant dense<0.000000e+00> : vector<2x128xf32>
    %47 = tpu.matmul %46, %15, %cst_27 {dimension_numbers = #tpu.dot_dimension_numbers<[1], [0], [0], [1], [0, 0, 1, 1], [], []>} : vector<2x32xbf16>, vector<32x128xbf16>, vector<2x128xf32> -> vector<2x128xf32>
    %48 = arith.addf %45, %47 : vector<2x128xf32>
    %49 = arith.negf %48 : vector<2x128xf32>
    %50 = math.exp %49 : vector<2x128xf32>
    %cst_28 = arith.constant 1.000000e+00 : f32
    %51 = vector.broadcast %cst_28 : f32 to vector<2x128xf32>
    %52 = arith.addf %51, %50 : vector<2x128xf32>
    %53 = arith.divf %51, %52 : vector<2x128xf32>
    %54 = math.tanh %48 : vector<2x128xf32>
    %55 = vector.extract_strided_slice %53 {offsets = [0, 32], sizes = [2, 32], strides = [1, 1]} : vector<2x128xf32> to vector<2x32xf32>
    %56 = arith.mulf %55, %41 : vector<2x32xf32>
    %57 = vector.extract_strided_slice %53 {offsets = [0, 0], sizes = [2, 32], strides = [1, 1]} : vector<2x128xf32> to vector<2x32xf32>
    %58 = vector.extract_strided_slice %54 {offsets = [0, 64], sizes = [2, 32], strides = [1, 1]} : vector<2x128xf32> to vector<2x32xf32>
    %59 = arith.mulf %57, %58 : vector<2x32xf32>
    %60 = arith.addf %56, %59 : vector<2x32xf32>
    %61 = vector.extract_strided_slice %53 {offsets = [0, 96], sizes = [2, 32], strides = [1, 1]} : vector<2x128xf32> to vector<2x32xf32>
    %62 = math.tanh %60 : vector<2x32xf32>
    %63 = arith.mulf %61, %62 : vector<2x32xf32>
    %64 = tpu.concatenate %44, %21 in 1 : vector<2x32xf32>, vector<2x32xf32> -> vector<2x64xf32>
    %65 = arith.truncf %64 : vector<2x64xf32> to vector<2x64xbf16>
    %cst_29 = arith.constant dense<0.000000e+00> : vector<2x128xf32>
    %66 = tpu.matmul %65, %16, %cst_29 {dimension_numbers = #tpu.dot_dimension_numbers<[1], [0], [0], [1], [0, 0, 1, 1], [], []>} : vector<2x64xbf16>, vector<64x128xbf16>, vector<2x128xf32> -> vector<2x128xf32>
    %67 = vector.broadcast %17 : vector<1x128xf32> to vector<2x128xf32>
    %68 = arith.addf %66, %67 : vector<2x128xf32>
    %69 = arith.negf %68 : vector<2x128xf32>
    %70 = math.exp %69 : vector<2x128xf32>
    %cst_30 = arith.constant 1.000000e+00 : f32
    %71 = vector.broadcast %cst_30 : f32 to vector<2x128xf32>
    %72 = arith.addf %71, %70 : vector<2x128xf32>
    %73 = arith.divf %71, %72 : vector<2x128xf32>
    %74 = math.tanh %68 : vector<2x128xf32>
    %75 = vector.extract_strided_slice %73 {offsets = [0, 32], sizes = [2, 32], strides = [1, 1]} : vector<2x128xf32> to vector<2x32xf32>
    %76 = arith.mulf %75, %25 : vector<2x32xf32>
    %77 = vector.extract_strided_slice %73 {offsets = [0, 0], sizes = [2, 32], strides = [1, 1]} : vector<2x128xf32> to vector<2x32xf32>
    %78 = vector.extract_strided_slice %74 {offsets = [0, 64], sizes = [2, 32], strides = [1, 1]} : vector<2x128xf32> to vector<2x32xf32>
    %79 = arith.mulf %77, %78 : vector<2x32xf32>
    %80 = arith.addf %76, %79 : vector<2x32xf32>
    %81 = vector.extract_strided_slice %73 {offsets = [0, 96], sizes = [2, 32], strides = [1, 1]} : vector<2x128xf32> to vector<2x32xf32>
    %82 = math.tanh %80 : vector<2x32xf32>
    %83 = arith.mulf %81, %82 : vector<2x32xf32>
    %84 = vector.extract_strided_slice %14 {offsets = [4, 0], sizes = [2, 128], strides = [1, 1]} : vector<16x128xf32> to vector<2x128xf32>
    %85 = arith.truncf %63 : vector<2x32xf32> to vector<2x32xbf16>
    %cst_31 = arith.constant dense<0.000000e+00> : vector<2x128xf32>
    %86 = tpu.matmul %85, %15, %cst_31 {dimension_numbers = #tpu.dot_dimension_numbers<[1], [0], [0], [1], [0, 0, 1, 1], [], []>} : vector<2x32xbf16>, vector<32x128xbf16>, vector<2x128xf32> -> vector<2x128xf32>
    %87 = arith.addf %84, %86 : vector<2x128xf32>
    %88 = arith.negf %87 : vector<2x128xf32>
    %89 = math.exp %88 : vector<2x128xf32>
    %cst_32 = arith.constant 1.000000e+00 : f32
    %90 = vector.broadcast %cst_32 : f32 to vector<2x128xf32>
    %91 = arith.addf %90, %89 : vector<2x128xf32>
    %92 = arith.divf %90, %91 : vector<2x128xf32>
    %93 = math.tanh %87 : vector<2x128xf32>
    %94 = vector.extract_strided_slice %92 {offsets = [0, 32], sizes = [2, 32], strides = [1, 1]} : vector<2x128xf32> to vector<2x32xf32>
    %95 = arith.mulf %94, %60 : vector<2x32xf32>
    %96 = vector.extract_strided_slice %92 {offsets = [0, 0], sizes = [2, 32], strides = [1, 1]} : vector<2x128xf32> to vector<2x32xf32>
    %97 = vector.extract_strided_slice %93 {offsets = [0, 64], sizes = [2, 32], strides = [1, 1]} : vector<2x128xf32> to vector<2x32xf32>
    %98 = arith.mulf %96, %97 : vector<2x32xf32>
    %99 = arith.addf %95, %98 : vector<2x32xf32>
    %100 = vector.extract_strided_slice %92 {offsets = [0, 96], sizes = [2, 32], strides = [1, 1]} : vector<2x128xf32> to vector<2x32xf32>
    %101 = math.tanh %99 : vector<2x32xf32>
    %102 = arith.mulf %100, %101 : vector<2x32xf32>
    %103 = tpu.concatenate %63, %83 in 1 : vector<2x32xf32>, vector<2x32xf32> -> vector<2x64xf32>
    %104 = arith.truncf %103 : vector<2x64xf32> to vector<2x64xbf16>
    %cst_33 = arith.constant dense<0.000000e+00> : vector<2x128xf32>
    %105 = tpu.matmul %104, %16, %cst_33 {dimension_numbers = #tpu.dot_dimension_numbers<[1], [0], [0], [1], [0, 0, 1, 1], [], []>} : vector<2x64xbf16>, vector<64x128xbf16>, vector<2x128xf32> -> vector<2x128xf32>
    %106 = vector.broadcast %17 : vector<1x128xf32> to vector<2x128xf32>
    %107 = arith.addf %105, %106 : vector<2x128xf32>
    %108 = arith.negf %107 : vector<2x128xf32>
    %109 = math.exp %108 : vector<2x128xf32>
    %cst_34 = arith.constant 1.000000e+00 : f32
    %110 = vector.broadcast %cst_34 : f32 to vector<2x128xf32>
    %111 = arith.addf %110, %109 : vector<2x128xf32>
    %112 = arith.divf %110, %111 : vector<2x128xf32>
    %113 = math.tanh %107 : vector<2x128xf32>
    %114 = vector.extract_strided_slice %112 {offsets = [0, 32], sizes = [2, 32], strides = [1, 1]} : vector<2x128xf32> to vector<2x32xf32>
    %115 = arith.mulf %114, %80 : vector<2x32xf32>
    %116 = vector.extract_strided_slice %112 {offsets = [0, 0], sizes = [2, 32], strides = [1, 1]} : vector<2x128xf32> to vector<2x32xf32>
    %117 = vector.extract_strided_slice %113 {offsets = [0, 64], sizes = [2, 32], strides = [1, 1]} : vector<2x128xf32> to vector<2x32xf32>
    %118 = arith.mulf %116, %117 : vector<2x32xf32>
    %119 = arith.addf %115, %118 : vector<2x32xf32>
    %120 = vector.extract_strided_slice %112 {offsets = [0, 96], sizes = [2, 32], strides = [1, 1]} : vector<2x128xf32> to vector<2x32xf32>
    %121 = math.tanh %119 : vector<2x32xf32>
    %122 = arith.mulf %120, %121 : vector<2x32xf32>
    %123 = vector.extract_strided_slice %14 {offsets = [6, 0], sizes = [2, 128], strides = [1, 1]} : vector<16x128xf32> to vector<2x128xf32>
    %124 = arith.truncf %102 : vector<2x32xf32> to vector<2x32xbf16>
    %cst_35 = arith.constant dense<0.000000e+00> : vector<2x128xf32>
    %125 = tpu.matmul %124, %15, %cst_35 {dimension_numbers = #tpu.dot_dimension_numbers<[1], [0], [0], [1], [0, 0, 1, 1], [], []>} : vector<2x32xbf16>, vector<32x128xbf16>, vector<2x128xf32> -> vector<2x128xf32>
    %126 = arith.addf %123, %125 : vector<2x128xf32>
    %127 = arith.negf %126 : vector<2x128xf32>
    %128 = math.exp %127 : vector<2x128xf32>
    %cst_36 = arith.constant 1.000000e+00 : f32
    %129 = vector.broadcast %cst_36 : f32 to vector<2x128xf32>
    %130 = arith.addf %129, %128 : vector<2x128xf32>
    %131 = arith.divf %129, %130 : vector<2x128xf32>
    %132 = math.tanh %126 : vector<2x128xf32>
    %133 = vector.extract_strided_slice %131 {offsets = [0, 32], sizes = [2, 32], strides = [1, 1]} : vector<2x128xf32> to vector<2x32xf32>
    %134 = arith.mulf %133, %99 : vector<2x32xf32>
    %135 = vector.extract_strided_slice %131 {offsets = [0, 0], sizes = [2, 32], strides = [1, 1]} : vector<2x128xf32> to vector<2x32xf32>
    %136 = vector.extract_strided_slice %132 {offsets = [0, 64], sizes = [2, 32], strides = [1, 1]} : vector<2x128xf32> to vector<2x32xf32>
    %137 = arith.mulf %135, %136 : vector<2x32xf32>
    %138 = arith.addf %134, %137 : vector<2x32xf32>
    %139 = vector.extract_strided_slice %131 {offsets = [0, 96], sizes = [2, 32], strides = [1, 1]} : vector<2x128xf32> to vector<2x32xf32>
    %140 = math.tanh %138 : vector<2x32xf32>
    %141 = arith.mulf %139, %140 : vector<2x32xf32>
    %142 = tpu.concatenate %102, %122 in 1 : vector<2x32xf32>, vector<2x32xf32> -> vector<2x64xf32>
    %143 = arith.truncf %142 : vector<2x64xf32> to vector<2x64xbf16>
    %cst_37 = arith.constant dense<0.000000e+00> : vector<2x128xf32>
    %144 = tpu.matmul %143, %16, %cst_37 {dimension_numbers = #tpu.dot_dimension_numbers<[1], [0], [0], [1], [0, 0, 1, 1], [], []>} : vector<2x64xbf16>, vector<64x128xbf16>, vector<2x128xf32> -> vector<2x128xf32>
    %145 = vector.broadcast %17 : vector<1x128xf32> to vector<2x128xf32>
    %146 = arith.addf %144, %145 : vector<2x128xf32>
    %147 = arith.negf %146 : vector<2x128xf32>
    %148 = math.exp %147 : vector<2x128xf32>
    %cst_38 = arith.constant 1.000000e+00 : f32
    %149 = vector.broadcast %cst_38 : f32 to vector<2x128xf32>
    %150 = arith.addf %149, %148 : vector<2x128xf32>
    %151 = arith.divf %149, %150 : vector<2x128xf32>
    %152 = math.tanh %146 : vector<2x128xf32>
    %153 = vector.extract_strided_slice %151 {offsets = [0, 32], sizes = [2, 32], strides = [1, 1]} : vector<2x128xf32> to vector<2x32xf32>
    %154 = arith.mulf %153, %119 : vector<2x32xf32>
    %155 = vector.extract_strided_slice %151 {offsets = [0, 0], sizes = [2, 32], strides = [1, 1]} : vector<2x128xf32> to vector<2x32xf32>
    %156 = vector.extract_strided_slice %152 {offsets = [0, 64], sizes = [2, 32], strides = [1, 1]} : vector<2x128xf32> to vector<2x32xf32>
    %157 = arith.mulf %155, %156 : vector<2x32xf32>
    %158 = arith.addf %154, %157 : vector<2x32xf32>
    %159 = vector.extract_strided_slice %151 {offsets = [0, 96], sizes = [2, 32], strides = [1, 1]} : vector<2x128xf32> to vector<2x32xf32>
    %160 = math.tanh %158 : vector<2x32xf32>
    %161 = arith.mulf %159, %160 : vector<2x32xf32>
    %162 = vector.extract_strided_slice %14 {offsets = [8, 0], sizes = [2, 128], strides = [1, 1]} : vector<16x128xf32> to vector<2x128xf32>
    %163 = arith.truncf %141 : vector<2x32xf32> to vector<2x32xbf16>
    %cst_39 = arith.constant dense<0.000000e+00> : vector<2x128xf32>
    %164 = tpu.matmul %163, %15, %cst_39 {dimension_numbers = #tpu.dot_dimension_numbers<[1], [0], [0], [1], [0, 0, 1, 1], [], []>} : vector<2x32xbf16>, vector<32x128xbf16>, vector<2x128xf32> -> vector<2x128xf32>
    %165 = arith.addf %162, %164 : vector<2x128xf32>
    %166 = arith.negf %165 : vector<2x128xf32>
    %167 = math.exp %166 : vector<2x128xf32>
    %cst_40 = arith.constant 1.000000e+00 : f32
    %168 = vector.broadcast %cst_40 : f32 to vector<2x128xf32>
    %169 = arith.addf %168, %167 : vector<2x128xf32>
    %170 = arith.divf %168, %169 : vector<2x128xf32>
    %171 = math.tanh %165 : vector<2x128xf32>
    %172 = vector.extract_strided_slice %170 {offsets = [0, 32], sizes = [2, 32], strides = [1, 1]} : vector<2x128xf32> to vector<2x32xf32>
    %173 = arith.mulf %172, %138 : vector<2x32xf32>
    %174 = vector.extract_strided_slice %170 {offsets = [0, 0], sizes = [2, 32], strides = [1, 1]} : vector<2x128xf32> to vector<2x32xf32>
    %175 = vector.extract_strided_slice %171 {offsets = [0, 64], sizes = [2, 32], strides = [1, 1]} : vector<2x128xf32> to vector<2x32xf32>
    %176 = arith.mulf %174, %175 : vector<2x32xf32>
    %177 = arith.addf %173, %176 : vector<2x32xf32>
    %178 = vector.extract_strided_slice %170 {offsets = [0, 96], sizes = [2, 32], strides = [1, 1]} : vector<2x128xf32> to vector<2x32xf32>
    %179 = math.tanh %177 : vector<2x32xf32>
    %180 = arith.mulf %178, %179 : vector<2x32xf32>
    %181 = tpu.concatenate %141, %161 in 1 : vector<2x32xf32>, vector<2x32xf32> -> vector<2x64xf32>
    %182 = arith.truncf %181 : vector<2x64xf32> to vector<2x64xbf16>
    %cst_41 = arith.constant dense<0.000000e+00> : vector<2x128xf32>
    %183 = tpu.matmul %182, %16, %cst_41 {dimension_numbers = #tpu.dot_dimension_numbers<[1], [0], [0], [1], [0, 0, 1, 1], [], []>} : vector<2x64xbf16>, vector<64x128xbf16>, vector<2x128xf32> -> vector<2x128xf32>
    %184 = vector.broadcast %17 : vector<1x128xf32> to vector<2x128xf32>
    %185 = arith.addf %183, %184 : vector<2x128xf32>
    %186 = arith.negf %185 : vector<2x128xf32>
    %187 = math.exp %186 : vector<2x128xf32>
    %cst_42 = arith.constant 1.000000e+00 : f32
    %188 = vector.broadcast %cst_42 : f32 to vector<2x128xf32>
    %189 = arith.addf %188, %187 : vector<2x128xf32>
    %190 = arith.divf %188, %189 : vector<2x128xf32>
    %191 = math.tanh %185 : vector<2x128xf32>
    %192 = vector.extract_strided_slice %190 {offsets = [0, 32], sizes = [2, 32], strides = [1, 1]} : vector<2x128xf32> to vector<2x32xf32>
    %193 = arith.mulf %192, %158 : vector<2x32xf32>
    %194 = vector.extract_strided_slice %190 {offsets = [0, 0], sizes = [2, 32], strides = [1, 1]} : vector<2x128xf32> to vector<2x32xf32>
    %195 = vector.extract_strided_slice %191 {offsets = [0, 64], sizes = [2, 32], strides = [1, 1]} : vector<2x128xf32> to vector<2x32xf32>
    %196 = arith.mulf %194, %195 : vector<2x32xf32>
    %197 = arith.addf %193, %196 : vector<2x32xf32>
    %198 = vector.extract_strided_slice %190 {offsets = [0, 96], sizes = [2, 32], strides = [1, 1]} : vector<2x128xf32> to vector<2x32xf32>
    %199 = math.tanh %197 : vector<2x32xf32>
    %200 = arith.mulf %198, %199 : vector<2x32xf32>
    %201 = vector.extract_strided_slice %14 {offsets = [10, 0], sizes = [2, 128], strides = [1, 1]} : vector<16x128xf32> to vector<2x128xf32>
    %202 = arith.truncf %180 : vector<2x32xf32> to vector<2x32xbf16>
    %cst_43 = arith.constant dense<0.000000e+00> : vector<2x128xf32>
    %203 = tpu.matmul %202, %15, %cst_43 {dimension_numbers = #tpu.dot_dimension_numbers<[1], [0], [0], [1], [0, 0, 1, 1], [], []>} : vector<2x32xbf16>, vector<32x128xbf16>, vector<2x128xf32> -> vector<2x128xf32>
    %204 = arith.addf %201, %203 : vector<2x128xf32>
    %205 = arith.negf %204 : vector<2x128xf32>
    %206 = math.exp %205 : vector<2x128xf32>
    %cst_44 = arith.constant 1.000000e+00 : f32
    %207 = vector.broadcast %cst_44 : f32 to vector<2x128xf32>
    %208 = arith.addf %207, %206 : vector<2x128xf32>
    %209 = arith.divf %207, %208 : vector<2x128xf32>
    %210 = math.tanh %204 : vector<2x128xf32>
    %211 = vector.extract_strided_slice %209 {offsets = [0, 32], sizes = [2, 32], strides = [1, 1]} : vector<2x128xf32> to vector<2x32xf32>
    %212 = arith.mulf %211, %177 : vector<2x32xf32>
    %213 = vector.extract_strided_slice %209 {offsets = [0, 0], sizes = [2, 32], strides = [1, 1]} : vector<2x128xf32> to vector<2x32xf32>
    %214 = vector.extract_strided_slice %210 {offsets = [0, 64], sizes = [2, 32], strides = [1, 1]} : vector<2x128xf32> to vector<2x32xf32>
    %215 = arith.mulf %213, %214 : vector<2x32xf32>
    %216 = arith.addf %212, %215 : vector<2x32xf32>
    %217 = vector.extract_strided_slice %209 {offsets = [0, 96], sizes = [2, 32], strides = [1, 1]} : vector<2x128xf32> to vector<2x32xf32>
    %218 = math.tanh %216 : vector<2x32xf32>
    %219 = arith.mulf %217, %218 : vector<2x32xf32>
    %220 = tpu.concatenate %180, %200 in 1 : vector<2x32xf32>, vector<2x32xf32> -> vector<2x64xf32>
    %221 = arith.truncf %220 : vector<2x64xf32> to vector<2x64xbf16>
    %cst_45 = arith.constant dense<0.000000e+00> : vector<2x128xf32>
    %222 = tpu.matmul %221, %16, %cst_45 {dimension_numbers = #tpu.dot_dimension_numbers<[1], [0], [0], [1], [0, 0, 1, 1], [], []>} : vector<2x64xbf16>, vector<64x128xbf16>, vector<2x128xf32> -> vector<2x128xf32>
    %223 = vector.broadcast %17 : vector<1x128xf32> to vector<2x128xf32>
    %224 = arith.addf %222, %223 : vector<2x128xf32>
    %225 = arith.negf %224 : vector<2x128xf32>
    %226 = math.exp %225 : vector<2x128xf32>
    %cst_46 = arith.constant 1.000000e+00 : f32
    %227 = vector.broadcast %cst_46 : f32 to vector<2x128xf32>
    %228 = arith.addf %227, %226 : vector<2x128xf32>
    %229 = arith.divf %227, %228 : vector<2x128xf32>
    %230 = math.tanh %224 : vector<2x128xf32>
    %231 = vector.extract_strided_slice %229 {offsets = [0, 32], sizes = [2, 32], strides = [1, 1]} : vector<2x128xf32> to vector<2x32xf32>
    %232 = arith.mulf %231, %197 : vector<2x32xf32>
    %233 = vector.extract_strided_slice %229 {offsets = [0, 0], sizes = [2, 32], strides = [1, 1]} : vector<2x128xf32> to vector<2x32xf32>
    %234 = vector.extract_strided_slice %230 {offsets = [0, 64], sizes = [2, 32], strides = [1, 1]} : vector<2x128xf32> to vector<2x32xf32>
    %235 = arith.mulf %233, %234 : vector<2x32xf32>
    %236 = arith.addf %232, %235 : vector<2x32xf32>
    %237 = vector.extract_strided_slice %229 {offsets = [0, 96], sizes = [2, 32], strides = [1, 1]} : vector<2x128xf32> to vector<2x32xf32>
    %238 = math.tanh %236 : vector<2x32xf32>
    %239 = arith.mulf %237, %238 : vector<2x32xf32>
    %240 = vector.extract_strided_slice %14 {offsets = [12, 0], sizes = [2, 128], strides = [1, 1]} : vector<16x128xf32> to vector<2x128xf32>
    %241 = arith.truncf %219 : vector<2x32xf32> to vector<2x32xbf16>
    %cst_47 = arith.constant dense<0.000000e+00> : vector<2x128xf32>
    %242 = tpu.matmul %241, %15, %cst_47 {dimension_numbers = #tpu.dot_dimension_numbers<[1], [0], [0], [1], [0, 0, 1, 1], [], []>} : vector<2x32xbf16>, vector<32x128xbf16>, vector<2x128xf32> -> vector<2x128xf32>
    %243 = arith.addf %240, %242 : vector<2x128xf32>
    %244 = arith.negf %243 : vector<2x128xf32>
    %245 = math.exp %244 : vector<2x128xf32>
    %cst_48 = arith.constant 1.000000e+00 : f32
    %246 = vector.broadcast %cst_48 : f32 to vector<2x128xf32>
    %247 = arith.addf %246, %245 : vector<2x128xf32>
    %248 = arith.divf %246, %247 : vector<2x128xf32>
    %249 = math.tanh %243 : vector<2x128xf32>
    %250 = vector.extract_strided_slice %248 {offsets = [0, 32], sizes = [2, 32], strides = [1, 1]} : vector<2x128xf32> to vector<2x32xf32>
    %251 = arith.mulf %250, %216 : vector<2x32xf32>
    %252 = vector.extract_strided_slice %248 {offsets = [0, 0], sizes = [2, 32], strides = [1, 1]} : vector<2x128xf32> to vector<2x32xf32>
    %253 = vector.extract_strided_slice %249 {offsets = [0, 64], sizes = [2, 32], strides = [1, 1]} : vector<2x128xf32> to vector<2x32xf32>
    %254 = arith.mulf %252, %253 : vector<2x32xf32>
    %255 = arith.addf %251, %254 : vector<2x32xf32>
    %256 = vector.extract_strided_slice %248 {offsets = [0, 96], sizes = [2, 32], strides = [1, 1]} : vector<2x128xf32> to vector<2x32xf32>
    %257 = math.tanh %255 : vector<2x32xf32>
    %258 = arith.mulf %256, %257 : vector<2x32xf32>
    %259 = tpu.concatenate %219, %239 in 1 : vector<2x32xf32>, vector<2x32xf32> -> vector<2x64xf32>
    %260 = arith.truncf %259 : vector<2x64xf32> to vector<2x64xbf16>
    %cst_49 = arith.constant dense<0.000000e+00> : vector<2x128xf32>
    %261 = tpu.matmul %260, %16, %cst_49 {dimension_numbers = #tpu.dot_dimension_numbers<[1], [0], [0], [1], [0, 0, 1, 1], [], []>} : vector<2x64xbf16>, vector<64x128xbf16>, vector<2x128xf32> -> vector<2x128xf32>
    %262 = vector.broadcast %17 : vector<1x128xf32> to vector<2x128xf32>
    %263 = arith.addf %261, %262 : vector<2x128xf32>
    %264 = arith.negf %263 : vector<2x128xf32>
    %265 = math.exp %264 : vector<2x128xf32>
    %cst_50 = arith.constant 1.000000e+00 : f32
    %266 = vector.broadcast %cst_50 : f32 to vector<2x128xf32>
    %267 = arith.addf %266, %265 : vector<2x128xf32>
    %268 = arith.divf %266, %267 : vector<2x128xf32>
    %269 = math.tanh %263 : vector<2x128xf32>
    %270 = vector.extract_strided_slice %268 {offsets = [0, 32], sizes = [2, 32], strides = [1, 1]} : vector<2x128xf32> to vector<2x32xf32>
    %271 = arith.mulf %270, %236 : vector<2x32xf32>
    %272 = vector.extract_strided_slice %268 {offsets = [0, 0], sizes = [2, 32], strides = [1, 1]} : vector<2x128xf32> to vector<2x32xf32>
    %273 = vector.extract_strided_slice %269 {offsets = [0, 64], sizes = [2, 32], strides = [1, 1]} : vector<2x128xf32> to vector<2x32xf32>
    %274 = arith.mulf %272, %273 : vector<2x32xf32>
    %275 = arith.addf %271, %274 : vector<2x32xf32>
    %276 = vector.extract_strided_slice %268 {offsets = [0, 96], sizes = [2, 32], strides = [1, 1]} : vector<2x128xf32> to vector<2x32xf32>
    %277 = math.tanh %275 : vector<2x32xf32>
    %278 = arith.mulf %276, %277 : vector<2x32xf32>
    %279 = vector.extract_strided_slice %14 {offsets = [14, 0], sizes = [2, 128], strides = [1, 1]} : vector<16x128xf32> to vector<2x128xf32>
    %280 = arith.truncf %258 : vector<2x32xf32> to vector<2x32xbf16>
    %cst_51 = arith.constant dense<0.000000e+00> : vector<2x128xf32>
    %281 = tpu.matmul %280, %15, %cst_51 {dimension_numbers = #tpu.dot_dimension_numbers<[1], [0], [0], [1], [0, 0, 1, 1], [], []>} : vector<2x32xbf16>, vector<32x128xbf16>, vector<2x128xf32> -> vector<2x128xf32>
    %282 = arith.addf %279, %281 : vector<2x128xf32>
    %283 = arith.negf %282 : vector<2x128xf32>
    %284 = math.exp %283 : vector<2x128xf32>
    %cst_52 = arith.constant 1.000000e+00 : f32
    %285 = vector.broadcast %cst_52 : f32 to vector<2x128xf32>
    %286 = arith.addf %285, %284 : vector<2x128xf32>
    %287 = arith.divf %285, %286 : vector<2x128xf32>
    %288 = math.tanh %282 : vector<2x128xf32>
    %289 = vector.extract_strided_slice %287 {offsets = [0, 32], sizes = [2, 32], strides = [1, 1]} : vector<2x128xf32> to vector<2x32xf32>
    %290 = arith.mulf %289, %255 : vector<2x32xf32>
    %291 = vector.extract_strided_slice %287 {offsets = [0, 0], sizes = [2, 32], strides = [1, 1]} : vector<2x128xf32> to vector<2x32xf32>
    %292 = vector.extract_strided_slice %288 {offsets = [0, 64], sizes = [2, 32], strides = [1, 1]} : vector<2x128xf32> to vector<2x32xf32>
    %293 = arith.mulf %291, %292 : vector<2x32xf32>
    %294 = arith.addf %290, %293 : vector<2x32xf32>
    %295 = vector.extract_strided_slice %287 {offsets = [0, 96], sizes = [2, 32], strides = [1, 1]} : vector<2x128xf32> to vector<2x32xf32>
    %296 = math.tanh %294 : vector<2x32xf32>
    %297 = arith.mulf %295, %296 : vector<2x32xf32>
    %298 = tpu.concatenate %258, %278 in 1 : vector<2x32xf32>, vector<2x32xf32> -> vector<2x64xf32>
    %299 = arith.truncf %298 : vector<2x64xf32> to vector<2x64xbf16>
    %cst_53 = arith.constant dense<0.000000e+00> : vector<2x128xf32>
    %300 = tpu.matmul %299, %16, %cst_53 {dimension_numbers = #tpu.dot_dimension_numbers<[1], [0], [0], [1], [0, 0, 1, 1], [], []>} : vector<2x64xbf16>, vector<64x128xbf16>, vector<2x128xf32> -> vector<2x128xf32>
    %301 = vector.broadcast %17 : vector<1x128xf32> to vector<2x128xf32>
    %302 = arith.addf %300, %301 : vector<2x128xf32>
    %303 = arith.negf %302 : vector<2x128xf32>
    %304 = math.exp %303 : vector<2x128xf32>
    %cst_54 = arith.constant 1.000000e+00 : f32
    %305 = vector.broadcast %cst_54 : f32 to vector<2x128xf32>
    %306 = arith.addf %305, %304 : vector<2x128xf32>
    %307 = arith.divf %305, %306 : vector<2x128xf32>
    %308 = math.tanh %302 : vector<2x128xf32>
    %309 = vector.extract_strided_slice %307 {offsets = [0, 32], sizes = [2, 32], strides = [1, 1]} : vector<2x128xf32> to vector<2x32xf32>
    %310 = arith.mulf %309, %275 : vector<2x32xf32>
    %311 = vector.extract_strided_slice %307 {offsets = [0, 0], sizes = [2, 32], strides = [1, 1]} : vector<2x128xf32> to vector<2x32xf32>
    %312 = vector.extract_strided_slice %308 {offsets = [0, 64], sizes = [2, 32], strides = [1, 1]} : vector<2x128xf32> to vector<2x32xf32>
    %313 = arith.mulf %311, %312 : vector<2x32xf32>
    %314 = arith.addf %310, %313 : vector<2x32xf32>
    %315 = vector.extract_strided_slice %307 {offsets = [0, 96], sizes = [2, 32], strides = [1, 1]} : vector<2x128xf32> to vector<2x32xf32>
    %316 = math.tanh %314 : vector<2x32xf32>
    %317 = arith.mulf %315, %316 : vector<2x32xf32>
    %318 = tpu.concatenate %297, %317 in 1 : vector<2x32xf32>, vector<2x32xf32> -> vector<2x64xf32>
    %319 = arith.truncf %318 : vector<2x64xf32> to vector<2x64xbf16>
    %cst_55 = arith.constant dense<0.000000e+00> : vector<2x128xf32>
    %320 = tpu.matmul %319, %16, %cst_55 {dimension_numbers = #tpu.dot_dimension_numbers<[1], [0], [0], [1], [0, 0, 1, 1], [], []>} : vector<2x64xbf16>, vector<64x128xbf16>, vector<2x128xf32> -> vector<2x128xf32>
    %321 = vector.broadcast %17 : vector<1x128xf32> to vector<2x128xf32>
    %322 = arith.addf %320, %321 : vector<2x128xf32>
    %323 = arith.negf %322 : vector<2x128xf32>
    %324 = math.exp %323 : vector<2x128xf32>
    %cst_56 = arith.constant 1.000000e+00 : f32
    %325 = vector.broadcast %cst_56 : f32 to vector<2x128xf32>
    %326 = arith.addf %325, %324 : vector<2x128xf32>
    %327 = arith.divf %325, %326 : vector<2x128xf32>
    %328 = math.tanh %322 : vector<2x128xf32>
    %329 = vector.extract_strided_slice %327 {offsets = [0, 32], sizes = [2, 32], strides = [1, 1]} : vector<2x128xf32> to vector<2x32xf32>
    %330 = arith.mulf %329, %314 : vector<2x32xf32>
    %331 = vector.extract_strided_slice %327 {offsets = [0, 0], sizes = [2, 32], strides = [1, 1]} : vector<2x128xf32> to vector<2x32xf32>
    %332 = vector.extract_strided_slice %328 {offsets = [0, 64], sizes = [2, 32], strides = [1, 1]} : vector<2x128xf32> to vector<2x32xf32>
    %333 = arith.mulf %331, %332 : vector<2x32xf32>
    %334 = arith.addf %330, %333 : vector<2x32xf32>
    %335 = vector.extract_strided_slice %327 {offsets = [0, 96], sizes = [2, 32], strides = [1, 1]} : vector<2x128xf32> to vector<2x32xf32>
    %336 = math.tanh %334 : vector<2x32xf32>
    %337 = arith.mulf %335, %336 : vector<2x32xf32>
    %338 = tpu.concatenate %83, %122, %161, %200, %239, %278, %317, %337 in 0 : vector<2x32xf32>, vector<2x32xf32>, vector<2x32xf32>, vector<2x32xf32>, vector<2x32xf32>, vector<2x32xf32>, vector<2x32xf32>, vector<2x32xf32> -> vector<16x32xf32>
    %339 = arith.truncf %338 : vector<16x32xf32> to vector<16x32xbf16>
    %c0_57 = arith.constant 0 : index
    %c0_58 = arith.constant 0 : index
    %340 = vector.load %arg9[%c0_57, %c0_58] : memref<32x128xbf16, #tpu.memory_space<vmem>>, vector<32x128xbf16>
    %cst_59 = arith.constant dense<0.000000e+00> : vector<16x128xf32>
    %341 = tpu.matmul %339, %340, %cst_59 {dimension_numbers = #tpu.dot_dimension_numbers<[1], [0], [0], [1], [0, 0, 1, 1], [], []>} : vector<16x32xbf16>, vector<32x128xbf16>, vector<16x128xf32> -> vector<16x128xf32>
    %c0_60 = arith.constant 0 : index
    %c0_61 = arith.constant 0 : index
    %342 = vector.load %arg10[%c0_60, %c0_61] : memref<1x128xf32, #tpu.memory_space<vmem>>, vector<1x128xf32>
    %343 = vector.broadcast %342 : vector<1x128xf32> to vector<16x128xf32>
    %344 = arith.addf %341, %343 : vector<16x128xf32>
    %c0_62 = arith.constant 0 : index
    %c0_63 = arith.constant 0 : index
    %345 = vector.load %arg11[%c0_62, %c0_63] : memref<16x128xf32, #tpu.memory_space<vmem>>, vector<16x128xf32>
    tpu.vector_store %arg11[%c0_62, %c0_63], %344 {strides = array<i32>} : memref<16x128xf32, #tpu.memory_space<vmem>>, vector<16x128xf32>,
    return
  }
}

</mosaic_0001>

<llo_original>
// kernel: tpu_custom_call.1
$region0: #{tpu_custom_call.1}
  #allocation0 [shape = 'u32[]', space=smem, size = 0x4, offset = 0x4, fixed_abs, tag = 'smem constant byte address 0x4 - core index']
  #allocation1 [shape = 'u32[144,128]{1,0:T(1,128)}', space=vmem, size = 0x12000, scoped, tag = 'internal scratch']
  %s0 = inlined_call_operand.vmem [shape: s32[16,1], index: 0, kind: input, shape index: {}]
  %s1 = inlined_call_operand.vmem [shape: bf16[64,32], index: 1, kind: input, shape index: {}]
  %s2 = inlined_call_operand.hbm [shape: f32[2,2,32], index: 2, kind: input, shape index: {}]
  %s3 = inlined_call_operand.hbm [shape: f32[2,2,32], index: 3, kind: input, shape index: {}]
  %s4 = inlined_call_operand.vmem [shape: bf16[32,128], index: 4, kind: input, shape index: {}]
  %s5 = inlined_call_operand.vmem [shape: bf16[32,128], index: 5, kind: input, shape index: {}]
  %s6 = inlined_call_operand.vmem [shape: f32[1,128], index: 6, kind: input, shape index: {}]
  %s7 = inlined_call_operand.vmem [shape: bf16[64,128], index: 7, kind: input, shape index: {}]
  %s8 = inlined_call_operand.vmem [shape: f32[1,128], index: 8, kind: input, shape index: {}]
  %s9 = inlined_call_operand.vmem [shape: bf16[32,128], index: 9, kind: input, shape index: {}]
  %s10 = inlined_call_operand.vmem [shape: f32[1,128], index: 10, kind: input, shape index: {}]
  %s11 = inlined_call_operand.hbm [shape: f32[16,128], index: 11, kind: output, shape index: {}]
  %s12 = sld [smem:[#allocation0]]
  $region62: #{tpu_custom_call.1} parent=0
    _
  %s14 = ssub.s32 1, %s12
  %s15 = scalar_select 0, %s14, %s12
  $region1: #{tpu_custom_call.1} parent=0
    #allocation2 [shape = 'u8[2048]{0}', space=vmem, size = 0x800, scoped, tag = 'input window, operand 2, single buffered']
    #allocation3 [shape = 's32[1]{0}', space=sflag, size = 0x4, scoped, tag = 'scoped memory for tpu_custom_call.1']
    #allocation4 [shape = 's32[1]{0}', space=sflag, size = 0x4, scoped, tag = 'scoped memory for tpu_custom_call.1']
    #allocation5 [shape = 'u8[2048]{0}', space=vmem, size = 0x800, scoped, tag = 'input window, operand 3, single buffered']
    #allocation6 [shape = 's32[1]{0}', space=sflag, size = 0x4, scoped, tag = 'scoped memory for tpu_custom_call.1']
    #allocation7 [shape = 'u8[8192]{0}', space=vmem, size = 0x2000, scoped, tag = 'output window, operand 0, single buffered']
    %16 = vsyncpa [#allocation3], 0
    %17 = vsyncpa [#allocation6], 0
    %18 = vsyncpa [#allocation4], 0
    // Predicated region
    $region2: #{tpu_custom_call.1} parent=1 // pred_check
      _
    $region3: #{tpu_custom_call.1} parent=1 // pred_check_branch
      %20 = sbr.rel (0) target = $region5
    $region4: #{tpu_custom_call.1} parent=1 // pred_region
      _
    $region5: #{tpu_custom_call.1} parent=1 // pred_fallthru
      _
    // Predicated region
    $region6: #{tpu_custom_call.1} parent=1 // pred_check
      _
    $region7: #{tpu_custom_call.1} parent=1 // pred_check_branch
      %22 = sbr.rel (0) target = $region9
    $region8: #{tpu_custom_call.1} parent=1 // pred_region
      _
    $region9: #{tpu_custom_call.1} parent=1 // pred_fallthru
      _
    // Predicated region
    $region10: #{tpu_custom_call.1} parent=1 // pred_check
      _
    $region11: #{tpu_custom_call.1} parent=1 // pred_check_branch
      %24 = sbr.rel (0) target = $region13
    $region12: #{tpu_custom_call.1} parent=1 // pred_region
      %s26 = ssub.s32 64, 64
      %27 = vsyncadd [#allocation3], %s26
      %s28 = sshll.u32 [#allocation2], 4
      %s29 = int_to_ptr.vmem [resolvable:$true] %s28
      %34 = dma.hbm_to_vmem [thread:$0]  %s2, 64, %s29, [#allocation3], 32, 32, 2
    $region13: #{tpu_custom_call.1} parent=1 // pred_fallthru
      _
    // Predicated region
    $region14: #{tpu_custom_call.1} parent=1 // pred_check
      _
    $region15: #{tpu_custom_call.1} parent=1 // pred_check_branch
      %36 = sbr.rel (0) target = $region17
    $region16: #{tpu_custom_call.1} parent=1 // pred_region
      %s38 = ssub.s32 64, 64
      %39 = vsyncadd [#allocation6], %s38
      %s40 = sshll.u32 [#allocation5], 4
      %s41 = int_to_ptr.vmem [resolvable:$true] %s40
      %46 = dma.hbm_to_vmem [thread:$0]  %s3, 64, %s41, [#allocation6], 32, 32, 2
    $region17: #{tpu_custom_call.1} parent=1 // pred_fallthru
      _
    // Predicated region
    $region18: #{tpu_custom_call.1} parent=1 // pred_check
      _
    $region19: #{tpu_custom_call.1} parent=1 // pred_check_branch
      %48 = sbr.rel (0) target = $region21
    $region20: #{tpu_custom_call.1} parent=1 // pred_region
      _
    $region21: #{tpu_custom_call.1} parent=1 // pred_fallthru
      _
    // Predicated region
    $region22: #{tpu_custom_call.1} parent=1 // pred_check
      _
    $region23: #{tpu_custom_call.1} parent=1 // pred_check_branch
      %50 = sbr.rel (0) target = $region25
    $region24: #{tpu_custom_call.1} parent=1 // pred_region
      _
    $region25: #{tpu_custom_call.1} parent=1 // pred_fallthru
      _
    // Predicated region
    $region26: #{tpu_custom_call.1} parent=1 // pred_check
      _
    $region27: #{tpu_custom_call.1} parent=1 // pred_check_branch
      %52 = sbr.rel (0) target = $region29
    $region28: #{tpu_custom_call.1} parent=1 // pred_region
      _
    $region29: #{tpu_custom_call.1} parent=1 // pred_fallthru
      _
    // Predicated region
    $region30: #{tpu_custom_call.1} parent=1 // pred_check
      _
    $region31: #{tpu_custom_call.1} parent=1 // pred_check_branch
      %54 = sbr.rel (0) target = $region33
    $region32: #{tpu_custom_call.1} parent=1 // pred_region
      _
    $region33: #{tpu_custom_call.1} parent=1 // pred_fallthru
      _
    // Predicated region
    $region34: #{tpu_custom_call.1} parent=1 // pred_check
      _
    $region35: #{tpu_custom_call.1} parent=1 // pred_check_branch
      %56 = sbr.rel (0) target = $region37
    $region36: #{tpu_custom_call.1} parent=1 // pred_region
      _
    $region37: #{tpu_custom_call.1} parent=1 // pred_fallthru
      _
    // Predicated region
    $region38: #{tpu_custom_call.1} parent=1 // pred_check
      _
    $region39: #{tpu_custom_call.1} parent=1 // pred_check_branch
      %58 = sbr.rel (0) target = $region41
    $region40: #{tpu_custom_call.1} parent=1 // pred_region
      _
    $region41: #{tpu_custom_call.1} parent=1 // pred_fallthru
      _
    // Predicated region
    $region42: #{tpu_custom_call.1} parent=1 // pred_check
      _
    $region43: #{tpu_custom_call.1} parent=1 // pred_check_branch
      %60 = sbr.rel (0) target = $region45
    $region44: #{tpu_custom_call.1} parent=1 // pred_region
      _
    $region45: #{tpu_custom_call.1} parent=1 // pred_fallthru
      _
    // Predicated region
    $region46: #{tpu_custom_call.1} parent=1 // pred_check
      _
    $region47: #{tpu_custom_call.1} parent=1 // pred_check_branch
      %62 = sbr.rel (0) target = $region49
    $region48: #{tpu_custom_call.1} parent=1 // pred_region
      %63 = dma.done [#allocation3], 64
    $region49: #{tpu_custom_call.1} parent=1 // pred_fallthru
      _
    // Predicated region
    $region50: #{tpu_custom_call.1} parent=1 // pred_check
      _
    $region51: #{tpu_custom_call.1} parent=1 // pred_check_branch
      %65 = sbr.rel (0) target = $region53
    $region52: #{tpu_custom_call.1} parent=1 // pred_region
      %66 = dma.done [#allocation6], 64
    $region53: #{tpu_custom_call.1} parent=1 // pred_fallthru
      _
    %v68 = vld [vmem:[%s0] sm:$0xff]
    %v69 = vld [vmem:[%s0 + $0x8] sm:$0xff]
    %v70 = vlaneseq
    %v71 = vand.u32 %v70, 127
    %72 = vset.pattern.permute.xlu0 0
    %73 = vperm.xlu0 %72, %v68
    %v74 = vpop.permute.xlu0 %73
    %75 = vset.pattern.permute.xlu0 0
    %76 = vperm.xlu0 %75, %v69
    %v77 = vpop.permute.xlu0 %76
    %vm78 = vcmp.eq.s32.totalorder %v71, %v74
    %vm79 = vcmp.eq.s32.totalorder %v71, %v77
    %v80 = vsel %vm78, 1, 0
    %v81 = vsel %vm79, 1, 0
    %v82 = vcvt.s32.f32 %v80
    %v83 = vcvt.s32.f32 %v81
    %v84 = vpack.c.bf16 %v83, %v82
    %v85 = vld [vmem:[%s1] sm:$0xf]
    %v86 = vld [vmem:[%s1 + $0x4] sm:$0xf]
    %v87 = vld [vmem:[%s1 + $0x8] sm:$0xf]
    %v88 = vld [vmem:[%s1 + $0xc] sm:$0xf]
    %v89 = vld [vmem:[%s1 + $0x10] sm:$0xf]
    %v90 = vld [vmem:[%s1 + $0x14] sm:$0xf]
    %v91 = vld [vmem:[%s1 + $0x18] sm:$0xf]
    %v92 = vld [vmem:[%s1 + $0x1c] sm:$0xf]
    %v101 = vunpack.c.l.b16 %v85
    %v102 = vunpack.c.l.b16 %v86
    %v103 = vunpack.c.l.b16 %v87
    %v104 = vunpack.c.l.b16 %v88
    %v105 = vunpack.c.l.b16 %v89
    %v106 = vunpack.c.l.b16 %v90
    %v107 = vunpack.c.l.b16 %v91
    %v108 = vunpack.c.l.b16 %v92
    %v109 = vpack.c.b16 %v102, %v101
    %v110 = vpack.c.b16 %v104, %v103
    %v111 = vpack.c.b16 %v106, %v105
    %v112 = vpack.c.b16 %v108, %v107
    %vm117 = vcmask 523264
    %v119 = vsel %vm117, %v84, 0
    %121 = vmatprep.subr.bf16.mxu0 0
    %122 = vmatpush1.bf16.msra.mxu0 %v109
    %123 = vmatprep.subr.bf16.mxu0 0
    %124 = vmatpush1.bf16.msra.mxu0 %v110
    %125 = vmatprep.subr.bf16.mxu0 0
    %126 = vmatpush1.bf16.msra.mxu0 %v111
    %127 = vmatprep.subr.bf16.mxu0 0
    %128 = vmatpush1.bf16.msra.mxu0 %v112
    %129 = vmatprep.subr.bf16.mxu0 0
    %130 = vmatpush1.bf16.msra.mxu0 0
    %131 = vmatprep.subr.bf16.mxu0 0
    %132 = vmatpush1.bf16.msra.mxu0 0
    %133 = vmatprep.subr.bf16.mxu0 0
    %134 = vmatpush1.bf16.msra.mxu0 0
    %135 = vmatprep.subr.bf16.mxu0 0
    %136 = vmatpush1.bf16.msra.mxu0 0
    %137 = vmatprep.subr.bf16.mxu0 0
    %138 = vmatpush1.bf16.msra.mxu0 0
    %139 = vmatprep.subr.bf16.mxu0 0
    %140 = vmatpush1.bf16.msra.mxu0 0
    %141 = vmatprep.subr.bf16.mxu0 0
    %142 = vmatpush1.bf16.msra.mxu0 0
    %143 = vmatprep.subr.bf16.mxu0 0
    %144 = vmatpush1.bf16.msra.mxu0 0
    %145 = vmatprep.subr.bf16.mxu0 0
    %146 = vmatpush1.bf16.msra.mxu0 0
    %147 = vmatprep.subr.bf16.mxu0 0
    %148 = vmatpush1.bf16.msra.mxu0 0
    %149 = vmatprep.subr.bf16.mxu0 0
    %150 = vmatpush1.bf16.msra.mxu0 0
    %151 = vmatprep.subr.bf16.mxu0 0
    %152 = vmatpush1.bf16.msra.mxu0 0
    %153 = vmatprep.mubr.bf16.mxu0 0
    %154 = vmatmul.mubr.bf16.gmra.mrb[0].mxu0 %v119
    %v155 = vpop.f32.mrb[0].mxu0
    %v156 = vadd.f32 0.0, %v155
    %v157 = vpop.f32.mrb[0].mxu0
    %v158 = vpop.f32.mrb[0].mxu0
    %v159 = vadd.f32 0.0, %v158
    %v160 = vpop.f32.mrb[0].mxu0
    %161 = vdwg.mxu0
    %v162 = vpack.c.bf16 %v159, %v156
    %v163 = vld [vmem:[%s4] sm:$0xf]
    %v164 = vld [vmem:[%s4 + $0x4] sm:$0xf]
    %v165 = vld [vmem:[%s4 + $0x8] sm:$0xf]
    %v166 = vld [vmem:[%s4 + $0xc] sm:$0xf]
    %v167 = vld [vmem:[%s6] sm:$0x1]
    %v169 = vlaneseq
    %v170 = vshrl.u32 %v169, 7
    %v171 = vsub.s32 0, %v170
    %v172 = vrot.slane %v167, %v171
    %v178 = vunpack.c.l.b16 %v163
    %v179 = vunpack.c.l.b16 %v164
    %v180 = vunpack.c.l.b16 %v165
    %v181 = vunpack.c.l.b16 %v166
    %v182 = vpack.c.b16 %v179, %v178
    %v183 = vpack.c.b16 %v181, %v180
    %vm186 = vcmask 261120
    %v188 = vsel %vm186, %v162, 0
    %190 = vmatprep.subr.bf16.mxu0 0
    %191 = vmatpush1.bf16.msra.mxu0 %v182
    %192 = vmatprep.subr.bf16.mxu0 0
    %193 = vmatpush1.bf16.msra.mxu0 %v183
    %194 = vmatprep.subr.bf16.mxu0 0
    %195 = vmatpush1.bf16.msra.mxu0 0
    %196 = vmatprep.subr.bf16.mxu0 0
    %197 = vmatpush1.bf16.msra.mxu0 0
    %198 = vmatprep.subr.bf16.mxu0 0
    %199 = vmatpush1.bf16.msra.mxu0 0
    %200 = vmatprep.subr.bf16.mxu0 0
    %201 = vmatpush1.bf16.msra.mxu0 0
    %202 = vmatprep.subr.bf16.mxu0 0
    %203 = vmatpush1.bf16.msra.mxu0 0
    %204 = vmatprep.subr.bf16.mxu0 0
    %205 = vmatpush1.bf16.msra.mxu0 0
    %206 = vmatprep.subr.bf16.mxu0 0
    %207 = vmatpush1.bf16.msra.mxu0 0
    %208 = vmatprep.subr.bf16.mxu0 0
    %209 = vmatpush1.bf16.msra.mxu0 0
    %210 = vmatprep.subr.bf16.mxu0 0
    %211 = vmatpush1.bf16.msra.mxu0 0
    %212 = vmatprep.subr.bf16.mxu0 0
    %213 = vmatpush1.bf16.msra.mxu0 0
    %214 = vmatprep.subr.bf16.mxu0 0
    %215 = vmatpush1.bf16.msra.mxu0 0
    %216 = vmatprep.subr.bf16.mxu0 0
    %217 = vmatpush1.bf16.msra.mxu0 0
    %218 = vmatprep.subr.bf16.mxu0 0
    %219 = vmatpush1.bf16.msra.mxu0 0
    %220 = vmatprep.subr.bf16.mxu0 0
    %221 = vmatpush1.bf16.msra.mxu0 0
    %222 = vmatprep.mubr.bf16.mxu0 0
    %223 = vmatmul.mubr.bf16.gmra.mrb[0].mxu0 %v188
    %v224 = vpop.f32.mrb[0].mxu0
    %v225 = vadd.f32 %v172, %v224
    %v226 = vpop.f32.mrb[0].mxu0
    %v227 = vpop.f32.mrb[0].mxu0
    %v228 = vadd.f32 %v172, %v227
    %v229 = vpop.f32.mrb[0].mxu0
    %230 = vdwg.mxu0
    %v231 = vld [vmem:[%s5] sm:$0xf]
    %v232 = vld [vmem:[%s5 + $0x4] sm:$0xf]
    %v233 = vld [vmem:[%s5 + $0x8] sm:$0xf]
    %v234 = vld [vmem:[%s5 + $0xc] sm:$0xf]
    %v235 = vld [vmem:[%s7] sm:$0xf]
    %v236 = vld [vmem:[%s7 + $0x4] sm:$0xf]
    %v237 = vld [vmem:[%s7 + $0x8] sm:$0xf]
    %v238 = vld [vmem:[%s7 + $0xc] sm:$0xf]
    %v239 = vld [vmem:[%s7 + $0x10] sm:$0xf]
    %v240 = vld [vmem:[%s7 + $0x14] sm:$0xf]
    %v241 = vld [vmem:[%s7 + $0x18] sm:$0xf]
    %v242 = vld [vmem:[%s7 + $0x1c] sm:$0xf]
    %v243 = vld [vmem:[%s8] sm:$0x1]
    %v244 = vld [vmem:[#allocation2] sm:$0x3]
    %s245 = scalar_lea.vmem [#allocation2], 2
    %v246 = vld [vmem:[%s245] sm:$0x3]
    %v247 = vld [vmem:[#allocation5] sm:$0x3]
    %s248 = scalar_lea.vmem [#allocation5], 2
    %v249 = vld [vmem:[%s248] sm:$0x3]
    %v250 = vpack.c.bf16 %v244, %v244
    %v255 = vunpack.c.l.b16 %v231
    %v256 = vunpack.c.l.b16 %v232
    %v257 = vunpack.c.l.b16 %v233
    %v258 = vunpack.c.l.b16 %v234
    %v259 = vpack.c.b16 %v256, %v255
    %v260 = vpack.c.b16 %v258, %v257
    %v264 = vsel %vm186, %v250, 0
    %266 = vmatprep.subr.bf16.mxu0 0
    %267 = vmatpush1.bf16.msra.mxu0 %v259
    %268 = vmatprep.subr.bf16.mxu0 0
    %269 = vmatpush1.bf16.msra.mxu0 %v260
    %270 = vmatprep.subr.bf16.mxu0 0
    %271 = vmatpush1.bf16.msra.mxu0 0
    %272 = vmatprep.subr.bf16.mxu0 0
    %273 = vmatpush1.bf16.msra.mxu0 0
    %274 = vmatprep.subr.bf16.mxu0 0
    %275 = vmatpush1.bf16.msra.mxu0 0
    %276 = vmatprep.subr.bf16.mxu0 0
    %277 = vmatpush1.bf16.msra.mxu0 0
    %278 = vmatprep.subr.bf16.mxu0 0
    %279 = vmatpush1.bf16.msra.mxu0 0
    %280 = vmatprep.subr.bf16.mxu0 0
    %281 = vmatpush1.bf16.msra.mxu0 0
    %282 = vmatprep.subr.bf16.mxu0 0
    %283 = vmatpush1.bf16.msra.mxu0 0
    %284 = vmatprep.subr.bf16.mxu0 0
    %285 = vmatpush1.bf16.msra.mxu0 0
    %286 = vmatprep.subr.bf16.mxu0 0
    %287 = vmatpush1.bf16.msra.mxu0 0
    %288 = vmatprep.subr.bf16.mxu0 0
    %289 = vmatpush1.bf16.msra.mxu0 0
    %290 = vmatprep.subr.bf16.mxu0 0
    %291 = vmatpush1.bf16.msra.mxu0 0
    %292 = vmatprep.subr.bf16.mxu0 0
    %293 = vmatpush1.bf16.msra.mxu0 0
    %294 = vmatprep.subr.bf16.mxu0 0
    %295 = vmatpush1.bf16.msra.mxu0 0
    %296 = vmatprep.subr.bf16.mxu0 0
    %297 = vmatpush1.bf16.msra.mxu0 0
    %298 = vmatprep.mubr.bf16.mxu0 0
    %299 = vmatmul.mubr.bf16.gmra.mrb[0].mxu0 %v264
    %v300 = vpop.f32.mrb[0].mxu0
    %v301 = vadd.f32 0.0, %v300
    %v302 = vpop.f32.mrb[0].mxu0
    %v303 = vpop.f32.mrb[0].mxu0
    %v304 = vpop.f32.mrb[0].mxu0
    %305 = vdwg.mxu0
    %v306 = vadd.f32 %v225, %v301
    %v307 = vxor.u32 %v306, 2147483648
    %v308 = vmul.f32 %v307, 1.442695
    %v309 = vpow.pop %v308
    %v310 = vadd.f32 %v309, 1.0
    %v311 = vrcp.pop %v310
    %v312 = vmul.f32 1.0, %v311
    %v313 = vtanh.pop %v306
    %315 = vrot.lane.b32.xlu0 %v247, 32
    %v316 = vpop.permute.xlu0 %315
    %v318 = vmul.f32 %v312, %v316
    %320 = vrot.lane.b32.xlu0 %v313, 64
    %v321 = vpop.permute.xlu0 %320
    %v323 = vmul.f32 %v312, %v321
    %325 = vrot.lane.b32.xlu0 %v323, 32
    %v326 = vpop.permute.xlu0 %325
    %v328 = vadd.f32 %v318, %v326
    %v329 = vtanh.pop %v328
    %331 = vrot.lane.b32.xlu0 %v329, 64
    %v332 = vpop.permute.xlu0 %331
    %v334 = vmul.f32 %v312, %v332
    %v335 = vpack.c.bf16 %v334, %v334
    %337 = vrot.lane.b32.xlu0 %v335, 32
    %v338 = vpop.permute.xlu0 %337
    %v340 = vsel %vm186, %v338, 0
    %342 = vmatprep.subr.bf16.mxu0 0
    %343 = vmatpush1.bf16.msra.mxu0 %v259
    %344 = vmatprep.subr.bf16.mxu0 0
    %345 = vmatpush1.bf16.msra.mxu0 %v260
    %346 = vmatprep.subr.bf16.mxu0 0
    %347 = vmatpush1.bf16.msra.mxu0 0
    %348 = vmatprep.subr.bf16.mxu0 0
    %349 = vmatpush1.bf16.msra.mxu0 0
    %350 = vmatprep.subr.bf16.mxu0 0
    %351 = vmatpush1.bf16.msra.mxu0 0
    %352 = vmatprep.subr.bf16.mxu0 0
    %353 = vmatpush1.bf16.msra.mxu0 0
    %354 = vmatprep.subr.bf16.mxu0 0
    %355 = vmatpush1.bf16.msra.mxu0 0
    %356 = vmatprep.subr.bf16.mxu0 0
    %357 = vmatpush1.bf16.msra.mxu0 0
    %358 = vmatprep.subr.bf16.mxu0 0
    %359 = vmatpush1.bf16.msra.mxu0 0
    %360 = vmatprep.subr.bf16.mxu0 0
    %361 = vmatpush1.bf16.msra.mxu0 0
    %362 = vmatprep.subr.bf16.mxu0 0
    %363 = vmatpush1.bf16.msra.mxu0 0
    %364 = vmatprep.subr.bf16.mxu0 0
    %365 = vmatpush1.bf16.msra.mxu0 0
    %366 = vmatprep.subr.bf16.mxu0 0
    %367 = vmatpush1.bf16.msra.mxu0 0
    %368 = vmatprep.subr.bf16.mxu0 0
    %369 = vmatpush1.bf16.msra.mxu0 0
    %370 = vmatprep.subr.bf16.mxu0 0
    %371 = vmatpush1.bf16.msra.mxu0 0
    %372 = vmatprep.subr.bf16.mxu0 0
    %373 = vmatpush1.bf16.msra.mxu0 0
    %374 = vmatprep.mubr.bf16.mxu0 0
    %375 = vmatmul.mubr.bf16.gmra.mrb[0].mxu0 %v340
    %v376 = vpop.f32.mrb[0].mxu0
    %v377 = vadd.f32 0.0, %v376
    %v378 = vpop.f32.mrb[0].mxu0
    %v379 = vpop.f32.mrb[0].mxu0
    %v380 = vpop.f32.mrb[0].mxu0
    %381 = vdwg.mxu0
    %v383 = vrot.slane %v377, 6
    %v385 = vadd.f32 %v225, %v383
    %v386 = vxor.u32 %v385, 2147483648
    %v387 = vmul.f32 %v386, 1.442695
    %v388 = vpow.pop %v387
    %v389 = vadd.f32 %v388, 1.0
    %v390 = vrcp.pop %v389
    %v391 = vmul.f32 1.0, %v390
    %v392 = vtanh.pop %v385
    %v394 = vrot.slane %v328, 6
    %v396 = vmul.f32 %v391, %v394
    %398 = vrot.lane.b32.xlu0 %v392, 64
    %v399 = vpop.permute.xlu0 %398
    %v401 = vmul.f32 %v391, %v399
    %403 = vrot.lane.b32.xlu0 %v401, 32
    %v404 = vpop.permute.xlu0 %403
    %v406 = vadd.f32 %v396, %v404
    %v407 = vtanh.pop %v406
    %409 = vrot.lane.b32.xlu0 %v407, 64
    %v410 = vpop.permute.xlu0 %409
    %v412 = vmul.f32 %v391, %v410
    %414 = vrot.lane.b32.xlu0 %v334, 32
    %v415 = vpop.permute.xlu0 %414
    %418 = vrot.lane.b32.xlu0 %v246, 32
    %v419 = vpop.permute.xlu0 %418
    %v421 = vsel %vm186, %v415, %v419
    %v422 = vpack.c.bf16 %v421, %v421
    %v424 = vlaneseq
    %v425 = vshrl.u32 %v424, 7
    %v426 = vsub.s32 0, %v425
    %v427 = vrot.slane %v243, %v426
    %v437 = vunpack.c.l.b16 %v235
    %v438 = vunpack.c.l.b16 %v236
    %v439 = vunpack.c.l.b16 %v237
    %v440 = vunpack.c.l.b16 %v238
    %v441 = vunpack.c.l.b16 %v239
    %v442 = vunpack.c.l.b16 %v240
    %v443 = vunpack.c.l.b16 %v241
    %v444 = vunpack.c.l.b16 %v242
    %v445 = vpack.c.b16 %v438, %v437
    %v446 = vpack.c.b16 %v440, %v439
    %v447 = vpack.c.b16 %v442, %v441
    %v448 = vpack.c.b16 %v444, %v443
    %v454 = vsel %vm117, %v422, 0
    %456 = vmatprep.subr.bf16.mxu0 0
    %457 = vmatpush1.bf16.msra.mxu0 %v445
    %458 = vmatprep.subr.bf16.mxu0 0
    %459 = vmatpush1.bf16.msra.mxu0 %v446
    %460 = vmatprep.subr.bf16.mxu0 0
    %461 = vmatpush1.bf16.msra.mxu0 %v447
    %462 = vmatprep.subr.bf16.mxu0 0
    %463 = vmatpush1.bf16.msra.mxu0 %v448
    %464 = vmatprep.subr.bf16.mxu0 0
    %465 = vmatpush1.bf16.msra.mxu0 0
    %466 = vmatprep.subr.bf16.mxu0 0
    %467 = vmatpush1.bf16.msra.mxu0 0
    %468 = vmatprep.subr.bf16.mxu0 0
    %469 = vmatpush1.bf16.msra.mxu0 0
    %470 = vmatprep.subr.bf16.mxu0 0
    %471 = vmatpush1.bf16.msra.mxu0 0
    %472 = vmatprep.subr.bf16.mxu0 0
    %473 = vmatpush1.bf16.msra.mxu0 0
    %474 = vmatprep.subr.bf16.mxu0 0
    %475 = vmatpush1.bf16.msra.mxu0 0
    %476 = vmatprep.subr.bf16.mxu0 0
    %477 = vmatpush1.bf16.msra.mxu0 0
    %478 = vmatprep.subr.bf16.mxu0 0
    %479 = vmatpush1.bf16.msra.mxu0 0
    %480 = vmatprep.subr.bf16.mxu0 0
    %481 = vmatpush1.bf16.msra.mxu0 0
    %482 = vmatprep.subr.bf16.mxu0 0
    %483 = vmatpush1.bf16.msra.mxu0 0
    %484 = vmatprep.subr.bf16.mxu0 0
    %485 = vmatpush1.bf16.msra.mxu0 0
    %486 = vmatprep.subr.bf16.mxu0 0
    %487 = vmatpush1.bf16.msra.mxu0 0
    %488 = vmatprep.mubr.bf16.mxu0 0
    %489 = vmatmul.mubr.bf16.gmra.mrb[0].mxu0 %v454
    %v490 = vpop.f32.mrb[0].mxu0
    %v491 = vadd.f32 %v427, %v490
    %v492 = vpop.f32.mrb[0].mxu0
    %v493 = vpop.f32.mrb[0].mxu0
    %v494 = vpop.f32.mrb[0].mxu0
    %495 = vdwg.mxu0
    %v496 = vxor.u32 %v491, 2147483648
    %v497 = vmul.f32 %v496, 1.442695
    %v498 = vpow.pop %v497
    %v499 = vadd.f32 %v498, 1.0
    %v500 = vrcp.pop %v499
    %v501 = vmul.f32 1.0, %v500
    %v502 = vtanh.pop %v491
    %504 = vrot.lane.b32.xlu0 %v249, 32
    %v505 = vpop.permute.xlu0 %504
    %v507 = vmul.f32 %v501, %v505
    %509 = vrot.lane.b32.xlu0 %v502, 64
    %v510 = vpop.permute.xlu0 %509
    %v512 = vmul.f32 %v501, %v510
    %514 = vrot.lane.b32.xlu0 %v512, 32
    %v515 = vpop.permute.xlu0 %514
    %v517 = vadd.f32 %v507, %v515
    %v518 = vtanh.pop %v517
    %520 = vrot.lane.b32.xlu0 %v518, 64
    %v521 = vpop.permute.xlu0 %520
    %v523 = vmul.f32 %v501, %v521
    %v524 = vpack.c.bf16 %v412, %v412
    %v526 = vrot.slane %v524, 1
    %527 = vrot.lane.b32.xlu0 %v526, 32
    %v528 = vpop.permute.xlu0 %527
    %v530 = vsel %vm186, %v528, 0
    %532 = vmatprep.subr.bf16.mxu0 0
    %533 = vmatpush1.bf16.msra.mxu0 %v259
    %534 = vmatprep.subr.bf16.mxu0 0
    %535 = vmatpush1.bf16.msra.mxu0 %v260
    %536 = vmatprep.subr.bf16.mxu0 0
    %537 = vmatpush1.bf16.msra.mxu0 0
    %538 = vmatprep.subr.bf16.mxu0 0
    %539 = vmatpush1.bf16.msra.mxu0 0
    %540 = vmatprep.subr.bf16.mxu0 0
    %541 = vmatpush1.bf16.msra.mxu0 0
    %542 = vmatprep.subr.bf16.mxu0 0
    %543 = vmatpush1.bf16.msra.mxu0 0
    %544 = vmatprep.subr.bf16.mxu0 0
    %545 = vmatpush1.bf16.msra.mxu0 0
    %546 = vmatprep.subr.bf16.mxu0 0
    %547 = vmatpush1.bf16.msra.mxu0 0
    %548 = vmatprep.subr.bf16.mxu0 0
    %549 = vmatpush1.bf16.msra.mxu0 0
    %550 = vmatprep.subr.bf16.mxu0 0
    %551 = vmatpush1.bf16.msra.mxu0 0
    %552 = vmatprep.subr.bf16.mxu0 0
    %553 = vmatpush1.bf16.msra.mxu0 0
    %554 = vmatprep.subr.bf16.mxu0 0
    %555 = vmatpush1.bf16.msra.mxu0 0
    %556 = vmatprep.subr.bf16.mxu0 0
    %557 = vmatpush1.bf16.msra.mxu0 0
    %558 = vmatprep.subr.bf16.mxu0 0
    %559 = vmatpush1.bf16.msra.mxu0 0
    %560 = vmatprep.subr.bf16.mxu0 0
    %561 = vmatpush1.bf16.msra.mxu0 0
    %562 = vmatprep.subr.bf16.mxu0 0
    %563 = vmatpush1.bf16.msra.mxu0 0
    %564 = vmatprep.mubr.bf16.mxu0 0
    %565 = vmatmul.mubr.bf16.gmra.mrb[0].mxu0 %v530
    %v566 = vpop.f32.mrb[0].mxu0
    %v567 = vadd.f32 0.0, %v566
    %v568 = vpop.f32.mrb[0].mxu0
    %v569 = vpop.f32.mrb[0].mxu0
    %v570 = vpop.f32.mrb[0].mxu0
    %571 = vdwg.mxu0
    %v573 = vrot.slane %v567, 4
    %v575 = vadd.f32 %v225, %v573
    %v576 = vxor.u32 %v575, 2147483648
    %v577 = vmul.f32 %v576, 1.442695
    %v578 = vpow.pop %v577
    %v579 = vadd.f32 %v578, 1.0
    %v580 = vrcp.pop %v579
    %v581 = vmul.f32 1.0, %v580
    %v582 = vtanh.pop %v575
    %v584 = vrot.slane %v406, 6
    %v586 = vmul.f32 %v581, %v584
    %588 = vrot.lane.b32.xlu0 %v582, 64
    %v589 = vpop.permute.xlu0 %588
    %v591 = vmul.f32 %v581, %v589
    %593 = vrot.lane.b32.xlu0 %v591, 32
    %v594 = vpop.permute.xlu0 %593
    %v596 = vadd.f32 %v586, %v594
    %v597 = vtanh.pop %v596
    %599 = vrot.lane.b32.xlu0 %v597, 64
    %v600 = vpop.permute.xlu0 %599
    %v602 = vmul.f32 %v581, %v600
    %604 = vrot.lane.b32.xlu0 %v412, 32
    %v605 = vpop.permute.xlu0 %604
    %v608 = vrot.slane %v523, 6
    %609 = vrot.lane.b32.xlu0 %v608, 64
    %v610 = vpop.permute.xlu0 %609
    %v612 = vsel %vm186, %v605, %v610
    %v613 = vpack.c.bf16 %v612, %v612
    %v615 = vrot.slane %v613, 1
    %v617 = vsel %vm117, %v615, 0
    %619 = vmatprep.subr.bf16.mxu0 0
    %620 = vmatpush1.bf16.msra.mxu0 %v445
    %621 = vmatprep.subr.bf16.mxu0 0
    %622 = vmatpush1.bf16.msra.mxu0 %v446
    %623 = vmatprep.subr.bf16.mxu0 0
    %624 = vmatpush1.bf16.msra.mxu0 %v447
    %625 = vmatprep.subr.bf16.mxu0 0
    %626 = vmatpush1.bf16.msra.mxu0 %v448
    %627 = vmatprep.subr.bf16.mxu0 0
    %628 = vmatpush1.bf16.msra.mxu0 0
    %629 = vmatprep.subr.bf16.mxu0 0
    %630 = vmatpush1.bf16.msra.mxu0 0
    %631 = vmatprep.subr.bf16.mxu0 0
    %632 = vmatpush1.bf16.msra.mxu0 0
    %633 = vmatprep.subr.bf16.mxu0 0
    %634 = vmatpush1.bf16.msra.mxu0 0
    %635 = vmatprep.subr.bf16.mxu0 0
    %636 = vmatpush1.bf16.msra.mxu0 0
    %637 = vmatprep.subr.bf16.mxu0 0
    %638 = vmatpush1.bf16.msra.mxu0 0
    %639 = vmatprep.subr.bf16.mxu0 0
    %640 = vmatpush1.bf16.msra.mxu0 0
    %641 = vmatprep.subr.bf16.mxu0 0
    %642 = vmatpush1.bf16.msra.mxu0 0
    %643 = vmatprep.subr.bf16.mxu0 0
    %644 = vmatpush1.bf16.msra.mxu0 0
    %645 = vmatprep.subr.bf16.mxu0 0
    %646 = vmatpush1.bf16.msra.mxu0 0
    %647 = vmatprep.subr.bf16.mxu0 0
    %648 = vmatpush1.bf16.msra.mxu0 0
    %649 = vmatprep.subr.bf16.mxu0 0
    %650 = vmatpush1.bf16.msra.mxu0 0
    %651 = vmatprep.mubr.bf16.mxu0 0
    %652 = vmatmul.mubr.bf16.gmra.mrb[0].mxu0 %v617
    %v653 = vpop.f32.mrb[0].mxu0
    %v654 = vadd.f32 %v427, %v653
    %v655 = vpop.f32.mrb[0].mxu0
    %v656 = vpop.f32.mrb[0].mxu0
    %v657 = vpop.f32.mrb[0].mxu0
    %658 = vdwg.mxu0
    %v659 = vxor.u32 %v654, 2147483648
    %v660 = vmul.f32 %v659, 1.442695
    %v661 = vpow.pop %v660
    %v662 = vadd.f32 %v661, 1.0
    %v663 = vrcp.pop %v662
    %v664 = vmul.f32 1.0, %v663
    %v665 = vtanh.pop %v654
    %v666 = vmul.f32 %v664, %v517
    %668 = vrot.lane.b32.xlu0 %v665, 64
    %v669 = vpop.permute.xlu0 %668
    %v671 = vmul.f32 %v664, %v669
    %673 = vrot.lane.b32.xlu0 %v671, 32
    %v674 = vpop.permute.xlu0 %673
    %v676 = vadd.f32 %v666, %v674
    %v677 = vtanh.pop %v676
    %679 = vrot.lane.b32.xlu0 %v677, 64
    %v680 = vpop.permute.xlu0 %679
    %v682 = vmul.f32 %v664, %v680
    %v683 = vpack.c.bf16 %v602, %v602
    %v685 = vrot.slane %v683, 2
    %686 = vrot.lane.b32.xlu0 %v685, 32
    %v687 = vpop.permute.xlu0 %686
    %v689 = vsel %vm186, %v687, 0
    %691 = vmatprep.subr.bf16.mxu0 0
    %692 = vmatpush1.bf16.msra.mxu0 %v259
    %693 = vmatprep.subr.bf16.mxu0 0
    %694 = vmatpush1.bf16.msra.mxu0 %v260
    %695 = vmatprep.subr.bf16.mxu0 0
    %696 = vmatpush1.bf16.msra.mxu0 0
    %697 = vmatprep.subr.bf16.mxu0 0
    %698 = vmatpush1.bf16.msra.mxu0 0
    %699 = vmatprep.subr.bf16.mxu0 0
    %700 = vmatpush1.bf16.msra.mxu0 0
    %701 = vmatprep.subr.bf16.mxu0 0
    %702 = vmatpush1.bf16.msra.mxu0 0
    %703 = vmatprep.subr.bf16.mxu0 0
    %704 = vmatpush1.bf16.msra.mxu0 0
    %705 = vmatprep.subr.bf16.mxu0 0
    %706 = vmatpush1.bf16.msra.mxu0 0
    %707 = vmatprep.subr.bf16.mxu0 0
    %708 = vmatpush1.bf16.msra.mxu0 0
    %709 = vmatprep.subr.bf16.mxu0 0
    %710 = vmatpush1.bf16.msra.mxu0 0
    %711 = vmatprep.subr.bf16.mxu0 0
    %712 = vmatpush1.bf16.msra.mxu0 0
    %713 = vmatprep.subr.bf16.mxu0 0
    %714 = vmatpush1.bf16.msra.mxu0 0
    %715 = vmatprep.subr.bf16.mxu0 0
    %716 = vmatpush1.bf16.msra.mxu0 0
    %717 = vmatprep.subr.bf16.mxu0 0
    %718 = vmatpush1.bf16.msra.mxu0 0
    %719 = vmatprep.subr.bf16.mxu0 0
    %720 = vmatpush1.bf16.msra.mxu0 0
    %721 = vmatprep.subr.bf16.mxu0 0
    %722 = vmatpush1.bf16.msra.mxu0 0
    %723 = vmatprep.mubr.bf16.mxu0 0
    %724 = vmatmul.mubr.bf16.gmra.mrb[0].mxu0 %v689
    %v725 = vpop.f32.mrb[0].mxu0
    %v726 = vadd.f32 0.0, %v725
    %v727 = vpop.f32.mrb[0].mxu0
    %v728 = vpop.f32.mrb[0].mxu0
    %v729 = vpop.f32.mrb[0].mxu0
    %730 = vdwg.mxu0
    %v732 = vrot.slane %v726, 2
    %v734 = vadd.f32 %v225, %v732
    %v735 = vxor.u32 %v734, 2147483648
    %v736 = vmul.f32 %v735, 1.442695
    %v737 = vpow.pop %v736
    %v738 = vadd.f32 %v737, 1.0
    %v739 = vrcp.pop %v738
    %v740 = vmul.f32 1.0, %v739
    %v741 = vtanh.pop %v734
    %v743 = vrot.slane %v596, 6
    %v745 = vmul.f32 %v740, %v743
    %747 = vrot.lane.b32.xlu0 %v741, 64
    %v748 = vpop.permute.xlu0 %747
    %v750 = vmul.f32 %v740, %v748
    %752 = vrot.lane.b32.xlu0 %v750, 32
    %v753 = vpop.permute.xlu0 %752
    %v755 = vadd.f32 %v745, %v753
    %v756 = vtanh.pop %v755
    %758 = vrot.lane.b32.xlu0 %v756, 64
    %v759 = vpop.permute.xlu0 %758
    %v761 = vmul.f32 %v740, %v759
    %763 = vrot.lane.b32.xlu0 %v602, 32
    %v764 = vpop.permute.xlu0 %763
    %v767 = vrot.slane %v682, 4
    %768 = vrot.lane.b32.xlu0 %v767, 64
    %v769 = vpop.permute.xlu0 %768
    %v771 = vsel %vm186, %v764, %v769
    %v772 = vpack.c.bf16 %v771, %v771
    %v774 = vrot.slane %v772, 2
    %v776 = vsel %vm117, %v774, 0
    %778 = vmatprep.subr.bf16.mxu0 0
    %779 = vmatpush1.bf16.msra.mxu0 %v445
    %780 = vmatprep.subr.bf16.mxu0 0
    %781 = vmatpush1.bf16.msra.mxu0 %v446
    %782 = vmatprep.subr.bf16.mxu0 0
    %783 = vmatpush1.bf16.msra.mxu0 %v447
    %784 = vmatprep.subr.bf16.mxu0 0
    %785 = vmatpush1.bf16.msra.mxu0 %v448
    %786 = vmatprep.subr.bf16.mxu0 0
    %787 = vmatpush1.bf16.msra.mxu0 0
    %788 = vmatprep.subr.bf16.mxu0 0
    %789 = vmatpush1.bf16.msra.mxu0 0
    %790 = vmatprep.subr.bf16.mxu0 0
    %791 = vmatpush1.bf16.msra.mxu0 0
    %792 = vmatprep.subr.bf16.mxu0 0
    %793 = vmatpush1.bf16.msra.mxu0 0
    %794 = vmatprep.subr.bf16.mxu0 0
    %795 = vmatpush1.bf16.msra.mxu0 0
    %796 = vmatprep.subr.bf16.mxu0 0
    %797 = vmatpush1.bf16.msra.mxu0 0
    %798 = vmatprep.subr.bf16.mxu0 0
    %799 = vmatpush1.bf16.msra.mxu0 0
    %800 = vmatprep.subr.bf16.mxu0 0
    %801 = vmatpush1.bf16.msra.mxu0 0
    %802 = vmatprep.subr.bf16.mxu0 0
    %803 = vmatpush1.bf16.msra.mxu0 0
    %804 = vmatprep.subr.bf16.mxu0 0
    %805 = vmatpush1.bf16.msra.mxu0 0
    %806 = vmatprep.subr.bf16.mxu0 0
    %807 = vmatpush1.bf16.msra.mxu0 0
    %808 = vmatprep.subr.bf16.mxu0 0
    %809 = vmatpush1.bf16.msra.mxu0 0
    %810 = vmatprep.mubr.bf16.mxu0 0
    %811 = vmatmul.mubr.bf16.gmra.mrb[0].mxu0 %v776
    %v812 = vpop.f32.mrb[0].mxu0
    %v813 = vadd.f32 %v427, %v812
    %v814 = vpop.f32.mrb[0].mxu0
    %v815 = vpop.f32.mrb[0].mxu0
    %v816 = vpop.f32.mrb[0].mxu0
    %817 = vdwg.mxu0
    %v818 = vxor.u32 %v813, 2147483648
    %v819 = vmul.f32 %v818, 1.442695
    %v820 = vpow.pop %v819
    %v821 = vadd.f32 %v820, 1.0
    %v822 = vrcp.pop %v821
    %v823 = vmul.f32 1.0, %v822
    %v824 = vtanh.pop %v813
    %v825 = vmul.f32 %v823, %v676
    %827 = vrot.lane.b32.xlu0 %v824, 64
    %v828 = vpop.permute.xlu0 %827
    %v830 = vmul.f32 %v823, %v828
    %832 = vrot.lane.b32.xlu0 %v830, 32
    %v833 = vpop.permute.xlu0 %832
    %v835 = vadd.f32 %v825, %v833
    %v836 = vtanh.pop %v835
    %838 = vrot.lane.b32.xlu0 %v836, 64
    %v839 = vpop.permute.xlu0 %838
    %v841 = vmul.f32 %v823, %v839
    %v842 = vpack.c.bf16 %v761, %v761
    %v844 = vrot.slane %v842, 3
    %845 = vrot.lane.b32.xlu0 %v844, 32
    %v846 = vpop.permute.xlu0 %845
    %v848 = vsel %vm186, %v846, 0
    %850 = vmatprep.subr.bf16.mxu0 0
    %851 = vmatpush1.bf16.msra.mxu0 %v259
    %852 = vmatprep.subr.bf16.mxu0 0
    %853 = vmatpush1.bf16.msra.mxu0 %v260
    %854 = vmatprep.subr.bf16.mxu0 0
    %855 = vmatpush1.bf16.msra.mxu0 0
    %856 = vmatprep.subr.bf16.mxu0 0
    %857 = vmatpush1.bf16.msra.mxu0 0
    %858 = vmatprep.subr.bf16.mxu0 0
    %859 = vmatpush1.bf16.msra.mxu0 0
    %860 = vmatprep.subr.bf16.mxu0 0
    %861 = vmatpush1.bf16.msra.mxu0 0
    %862 = vmatprep.subr.bf16.mxu0 0
    %863 = vmatpush1.bf16.msra.mxu0 0
    %864 = vmatprep.subr.bf16.mxu0 0
    %865 = vmatpush1.bf16.msra.mxu0 0
    %866 = vmatprep.subr.bf16.mxu0 0
    %867 = vmatpush1.bf16.msra.mxu0 0
    %868 = vmatprep.subr.bf16.mxu0 0
    %869 = vmatpush1.bf16.msra.mxu0 0
    %870 = vmatprep.subr.bf16.mxu0 0
    %871 = vmatpush1.bf16.msra.mxu0 0
    %872 = vmatprep.subr.bf16.mxu0 0
    %873 = vmatpush1.bf16.msra.mxu0 0
    %874 = vmatprep.subr.bf16.mxu0 0
    %875 = vmatpush1.bf16.msra.mxu0 0
    %876 = vmatprep.subr.bf16.mxu0 0
    %877 = vmatpush1.bf16.msra.mxu0 0
    %878 = vmatprep.subr.bf16.mxu0 0
    %879 = vmatpush1.bf16.msra.mxu0 0
    %880 = vmatprep.subr.bf16.mxu0 0
    %881 = vmatpush1.bf16.msra.mxu0 0
    %882 = vmatprep.mubr.bf16.mxu0 0
    %883 = vmatmul.mubr.bf16.gmra.mrb[0].mxu0 %v848
    %v884 = vpop.f32.mrb[0].mxu0
    %v885 = vadd.f32 0.0, %v884
    %v886 = vpop.f32.mrb[0].mxu0
    %v887 = vpop.f32.mrb[0].mxu0
    %v888 = vpop.f32.mrb[0].mxu0
    %889 = vdwg.mxu0
    %v890 = vadd.f32 %v228, %v885
    %v891 = vxor.u32 %v890, 2147483648
    %v892 = vmul.f32 %v891, 1.442695
    %v893 = vpow.pop %v892
    %v894 = vadd.f32 %v893, 1.0
    %v895 = vrcp.pop %v894
    %v896 = vmul.f32 1.0, %v895
    %v897 = vtanh.pop %v890
    %v899 = vrot.slane %v755, 6
    %v901 = vmul.f32 %v896, %v899
    %903 = vrot.lane.b32.xlu0 %v897, 64
    %v904 = vpop.permute.xlu0 %903
    %v906 = vmul.f32 %v896, %v904
    %908 = vrot.lane.b32.xlu0 %v906, 32
    %v909 = vpop.permute.xlu0 %908
    %v911 = vadd.f32 %v901, %v909
    %v912 = vtanh.pop %v911
    %914 = vrot.lane.b32.xlu0 %v912, 64
    %v915 = vpop.permute.xlu0 %914
    %v917 = vmul.f32 %v896, %v915
    %919 = vrot.lane.b32.xlu0 %v761, 32
    %v920 = vpop.permute.xlu0 %919
    %v923 = vrot.slane %v841, 2
    %924 = vrot.lane.b32.xlu0 %v923, 64
    %v925 = vpop.permute.xlu0 %924
    %v927 = vsel %vm186, %v920, %v925
    %v928 = vpack.c.bf16 %v927, %v927
    %v930 = vrot.slane %v928, 3
    %v932 = vsel %vm117, %v930, 0
    %934 = vmatprep.subr.bf16.mxu0 0
    %935 = vmatpush1.bf16.msra.mxu0 %v445
    %936 = vmatprep.subr.bf16.mxu0 0
    %937 = vmatpush1.bf16.msra.mxu0 %v446
    %938 = vmatprep.subr.bf16.mxu0 0
    %939 = vmatpush1.bf16.msra.mxu0 %v447
    %940 = vmatprep.subr.bf16.mxu0 0
    %941 = vmatpush1.bf16.msra.mxu0 %v448
    %942 = vmatprep.subr.bf16.mxu0 0
    %943 = vmatpush1.bf16.msra.mxu0 0
    %944 = vmatprep.subr.bf16.mxu0 0
    %945 = vmatpush1.bf16.msra.mxu0 0
    %946 = vmatprep.subr.bf16.mxu0 0
    %947 = vmatpush1.bf16.msra.mxu0 0
    %948 = vmatprep.subr.bf16.mxu0 0
    %949 = vmatpush1.bf16.msra.mxu0 0
    %950 = vmatprep.subr.bf16.mxu0 0
    %951 = vmatpush1.bf16.msra.mxu0 0
    %952 = vmatprep.subr.bf16.mxu0 0
    %953 = vmatpush1.bf16.msra.mxu0 0
    %954 = vmatprep.subr.bf16.mxu0 0
    %955 = vmatpush1.bf16.msra.mxu0 0
    %956 = vmatprep.subr.bf16.mxu0 0
    %957 = vmatpush1.bf16.msra.mxu0 0
    %958 = vmatprep.subr.bf16.mxu0 0
    %959 = vmatpush1.bf16.msra.mxu0 0
    %960 = vmatprep.subr.bf16.mxu0 0
    %961 = vmatpush1.bf16.msra.mxu0 0
    %962 = vmatprep.subr.bf16.mxu0 0
    %963 = vmatpush1.bf16.msra.mxu0 0
    %964 = vmatprep.subr.bf16.mxu0 0
    %965 = vmatpush1.bf16.msra.mxu0 0
    %966 = vmatprep.mubr.bf16.mxu0 0
    %967 = vmatmul.mubr.bf16.gmra.mrb[0].mxu0 %v932
    %v968 = vpop.f32.mrb[0].mxu0
    %v969 = vadd.f32 %v427, %v968
    %v970 = vpop.f32.mrb[0].mxu0
    %v971 = vpop.f32.mrb[0].mxu0
    %v972 = vpop.f32.mrb[0].mxu0
    %973 = vdwg.mxu0
    %v974 = vxor.u32 %v969, 2147483648
    %v975 = vmul.f32 %v974, 1.442695
    %v976 = vpow.pop %v975
    %v977 = vadd.f32 %v976, 1.0
    %v978 = vrcp.pop %v977
    %v979 = vmul.f32 1.0, %v978
    %v980 = vtanh.pop %v969
    %v981 = vmul.f32 %v979, %v835
    %983 = vrot.lane.b32.xlu0 %v980, 64
    %v984 = vpop.permute.xlu0 %983
    %v986 = vmul.f32 %v979, %v984
    %988 = vrot.lane.b32.xlu0 %v986, 32
    %v989 = vpop.permute.xlu0 %988
    %v991 = vadd.f32 %v981, %v989
    %v992 = vtanh.pop %v991
    %994 = vrot.lane.b32.xlu0 %v992, 64
    %v995 = vpop.permute.xlu0 %994
    %v997 = vmul.f32 %v979, %v995
    %v998 = vpack.c.bf16 %v917, %v917
    %1000 = vrot.lane.b32.xlu0 %v998, 32
    %v1001 = vpop.permute.xlu0 %1000
    %v1003 = vsel %vm186, %v1001, 0
    %1005 = vmatprep.subr.bf16.mxu0 0
    %1006 = vmatpush1.bf16.msra.mxu0 %v259
    %1007 = vmatprep.subr.bf16.mxu0 0
    %1008 = vmatpush1.bf16.msra.mxu0 %v260
    %1009 = vmatprep.subr.bf16.mxu0 0
    %1010 = vmatpush1.bf16.msra.mxu0 0
    %1011 = vmatprep.subr.bf16.mxu0 0
    %1012 = vmatpush1.bf16.msra.mxu0 0
    %1013 = vmatprep.subr.bf16.mxu0 0
    %1014 = vmatpush1.bf16.msra.mxu0 0
    %1015 = vmatprep.subr.bf16.mxu0 0
    %1016 = vmatpush1.bf16.msra.mxu0 0
    %1017 = vmatprep.subr.bf16.mxu0 0
    %1018 = vmatpush1.bf16.msra.mxu0 0
    %1019 = vmatprep.subr.bf16.mxu0 0
    %1020 = vmatpush1.bf16.msra.mxu0 0
    %1021 = vmatprep.subr.bf16.mxu0 0
    %1022 = vmatpush1.bf16.msra.mxu0 0
    %1023 = vmatprep.subr.bf16.mxu0 0
    %1024 = vmatpush1.bf16.msra.mxu0 0
    %1025 = vmatprep.subr.bf16.mxu0 0
    %1026 = vmatpush1.bf16.msra.mxu0 0
    %1027 = vmatprep.subr.bf16.mxu0 0
    %1028 = vmatpush1.bf16.msra.mxu0 0
    %1029 = vmatprep.subr.bf16.mxu0 0
    %1030 = vmatpush1.bf16.msra.mxu0 0
    %1031 = vmatprep.subr.bf16.mxu0 0
    %1032 = vmatpush1.bf16.msra.mxu0 0
    %1033 = vmatprep.subr.bf16.mxu0 0
    %1034 = vmatpush1.bf16.msra.mxu0 0
    %1035 = vmatprep.subr.bf16.mxu0 0
    %1036 = vmatpush1.bf16.msra.mxu0 0
    %1037 = vmatprep.mubr.bf16.mxu0 0
    %1038 = vmatmul.mubr.bf16.gmra.mrb[0].mxu0 %v1003
    %v1039 = vpop.f32.mrb[0].mxu0
    %v1040 = vadd.f32 0.0, %v1039
    %v1041 = vpop.f32.mrb[0].mxu0
    %v1042 = vpop.f32.mrb[0].mxu0
    %v1043 = vpop.f32.mrb[0].mxu0
    %1044 = vdwg.mxu0
    %v1046 = vrot.slane %v1040, 6
    %v1048 = vadd.f32 %v228, %v1046
    %v1049 = vxor.u32 %v1048, 2147483648
    %v1050 = vmul.f32 %v1049, 1.442695
    %v1051 = vpow.pop %v1050
    %v1052 = vadd.f32 %v1051, 1.0
    %v1053 = vrcp.pop %v1052
    %v1054 = vmul.f32 1.0, %v1053
    %v1055 = vtanh.pop %v1048
    %v1057 = vrot.slane %v911, 6
    %v1059 = vmul.f32 %v1054, %v1057
    %1061 = vrot.lane.b32.xlu0 %v1055, 64
    %v1062 = vpop.permute.xlu0 %1061
    %v1064 = vmul.f32 %v1054, %v1062
    %1066 = vrot.lane.b32.xlu0 %v1064, 32
    %v1067 = vpop.permute.xlu0 %1066
    %v1069 = vadd.f32 %v1059, %v1067
    %v1070 = vtanh.pop %v1069
    %1072 = vrot.lane.b32.xlu0 %v1070, 64
    %v1073 = vpop.permute.xlu0 %1072
    %v1075 = vmul.f32 %v1054, %v1073
    %1077 = vrot.lane.b32.xlu0 %v917, 32
    %v1078 = vpop.permute.xlu0 %1077
    %1081 = vrot.lane.b32.xlu0 %v997, 64
    %v1082 = vpop.permute.xlu0 %1081
    %v1084 = vsel %vm186, %v1078, %v1082
    %v1085 = vpack.c.bf16 %v1084, %v1084
    %v1087 = vsel %vm117, %v1085, 0
    %1089 = vmatprep.subr.bf16.mxu0 0
    %1090 = vmatpush1.bf16.msra.mxu0 %v445
    %1091 = vmatprep.subr.bf16.mxu0 0
    %1092 = vmatpush1.bf16.msra.mxu0 %v446
    %1093 = vmatprep.subr.bf16.mxu0 0
    %1094 = vmatpush1.bf16.msra.mxu0 %v447
    %1095 = vmatprep.subr.bf16.mxu0 0
    %1096 = vmatpush1.bf16.msra.mxu0 %v448
    %1097 = vmatprep.subr.bf16.mxu0 0
    %1098 = vmatpush1.bf16.msra.mxu0 0
    %1099 = vmatprep.subr.bf16.mxu0 0
    %1100 = vmatpush1.bf16.msra.mxu0 0
    %1101 = vmatprep.subr.bf16.mxu0 0
    %1102 = vmatpush1.bf16.msra.mxu0 0
    %1103 = vmatprep.subr.bf16.mxu0 0
    %1104 = vmatpush1.bf16.msra.mxu0 0
    %1105 = vmatprep.subr.bf16.mxu0 0
    %1106 = vmatpush1.bf16.msra.mxu0 0
    %1107 = vmatprep.subr.bf16.mxu0 0
    %1108 = vmatpush1.bf16.msra.mxu0 0
    %1109 = vmatprep.subr.bf16.mxu0 0
    %1110 = vmatpush1.bf16.msra.mxu0 0
    %1111 = vmatprep.subr.bf16.mxu0 0
    %1112 = vmatpush1.bf16.msra.mxu0 0
    %1113 = vmatprep.subr.bf16.mxu0 0
    %1114 = vmatpush1.bf16.msra.mxu0 0
    %1115 = vmatprep.subr.bf16.mxu0 0
    %1116 = vmatpush1.bf16.msra.mxu0 0
    %1117 = vmatprep.subr.bf16.mxu0 0
    %1118 = vmatpush1.bf16.msra.mxu0 0
    %1119 = vmatprep.subr.bf16.mxu0 0
    %1120 = vmatpush1.bf16.msra.mxu0 0
    %1121 = vmatprep.mubr.bf16.mxu0 0
    %1122 = vmatmul.mubr.bf16.gmra.mrb[0].mxu0 %v1087
    %v1123 = vpop.f32.mrb[0].mxu0
    %v1124 = vadd.f32 %v427, %v1123
    %v1125 = vpop.f32.mrb[0].mxu0
    %v1126 = vpop.f32.mrb[0].mxu0
    %v1127 = vpop.f32.mrb[0].mxu0
    %1128 = vdwg.mxu0
    %v1129 = vxor.u32 %v1124, 2147483648
    %v1130 = vmul.f32 %v1129, 1.442695
    %v1131 = vpow.pop %v1130
    %v1132 = vadd.f32 %v1131, 1.0
    %v1133 = vrcp.pop %v1132
    %v1134 = vmul.f32 1.0, %v1133
    %v1135 = vtanh.pop %v1124
    %v1136 = vmul.f32 %v1134, %v991
    %1138 = vrot.lane.b32.xlu0 %v1135, 64
    %v1139 = vpop.permute.xlu0 %1138
    %v1141 = vmul.f32 %v1134, %v1139
    %1143 = vrot.lane.b32.xlu0 %v1141, 32
    %v1144 = vpop.permute.xlu0 %1143
    %v1146 = vadd.f32 %v1136, %v1144
    %v1147 = vtanh.pop %v1146
    %1149 = vrot.lane.b32.xlu0 %v1147, 64
    %v1150 = vpop.permute.xlu0 %1149
    %v1152 = vmul.f32 %v1134, %v1150
    %v1153 = vpack.c.bf16 %v1075, %v1075
    %v1155 = vrot.slane %v1153, 1
    %1156 = vrot.lane.b32.xlu0 %v1155, 32
    %v1157 = vpop.permute.xlu0 %1156
    %v1159 = vsel %vm186, %v1157, 0
    %1161 = vmatprep.subr.bf16.mxu0 0
    %1162 = vmatpush1.bf16.msra.mxu0 %v259
    %1163 = vmatprep.subr.bf16.mxu0 0
    %1164 = vmatpush1.bf16.msra.mxu0 %v260
    %1165 = vmatprep.subr.bf16.mxu0 0
    %1166 = vmatpush1.bf16.msra.mxu0 0
    %1167 = vmatprep.subr.bf16.mxu0 0
    %1168 = vmatpush1.bf16.msra.mxu0 0
    %1169 = vmatprep.subr.bf16.mxu0 0
    %1170 = vmatpush1.bf16.msra.mxu0 0
    %1171 = vmatprep.subr.bf16.mxu0 0
    %1172 = vmatpush1.bf16.msra.mxu0 0
    %1173 = vmatprep.subr.bf16.mxu0 0
    %1174 = vmatpush1.bf16.msra.mxu0 0
    %1175 = vmatprep.subr.bf16.mxu0 0
    %1176 = vmatpush1.bf16.msra.mxu0 0
    %1177 = vmatprep.subr.bf16.mxu0 0
    %1178 = vmatpush1.bf16.msra.mxu0 0
    %1179 = vmatprep.subr.bf16.mxu0 0
    %1180 = vmatpush1.bf16.msra.mxu0 0
    %1181 = vmatprep.subr.bf16.mxu0 0
    %1182 = vmatpush1.bf16.msra.mxu0 0
    %1183 = vmatprep.subr.bf16.mxu0 0
    %1184 = vmatpush1.bf16.msra.mxu0 0
    %1185 = vmatprep.subr.bf16.mxu0 0
    %1186 = vmatpush1.bf16.msra.mxu0 0
    %1187 = vmatprep.subr.bf16.mxu0 0
    %1188 = vmatpush1.bf16.msra.mxu0 0
    %1189 = vmatprep.subr.bf16.mxu0 0
    %1190 = vmatpush1.bf16.msra.mxu0 0
    %1191 = vmatprep.subr.bf16.mxu0 0
    %1192 = vmatpush1.bf16.msra.mxu0 0
    %1193 = vmatprep.mubr.bf16.mxu0 0
    %1194 = vmatmul.mubr.bf16.gmra.mrb[0].mxu0 %v1159
    %v1195 = vpop.f32.mrb[0].mxu0
    %v1196 = vadd.f32 0.0, %v1195
    %v1197 = vpop.f32.mrb[0].mxu0
    %v1198 = vpop.f32.mrb[0].mxu0
    %v1199 = vpop.f32.mrb[0].mxu0
    %1200 = vdwg.mxu0
    %v1202 = vrot.slane %v1196, 4
    %v1204 = vadd.f32 %v228, %v1202
    %v1205 = vxor.u32 %v1204, 2147483648
    %v1206 = vmul.f32 %v1205, 1.442695
    %v1207 = vpow.pop %v1206
    %v1208 = vadd.f32 %v1207, 1.0
    %v1209 = vrcp.pop %v1208
    %v1210 = vmul.f32 1.0, %v1209
    %v1211 = vtanh.pop %v1204
    %v1213 = vrot.slane %v1069, 6
    %v1215 = vmul.f32 %v1210, %v1213
    %1217 = vrot.lane.b32.xlu0 %v1211, 64
    %v1218 = vpop.permute.xlu0 %1217
    %v1220 = vmul.f32 %v1210, %v1218
    %1222 = vrot.lane.b32.xlu0 %v1220, 32
    %v1223 = vpop.permute.xlu0 %1222
    %v1225 = vadd.f32 %v1215, %v1223
    %v1226 = vtanh.pop %v1225
    %1228 = vrot.lane.b32.xlu0 %v1226, 64
    %v1229 = vpop.permute.xlu0 %1228
    %v1231 = vmul.f32 %v1210, %v1229
    %1233 = vrot.lane.b32.xlu0 %v1075, 32
    %v1234 = vpop.permute.xlu0 %1233
    %v1237 = vrot.slane %v1152, 6
    %1238 = vrot.lane.b32.xlu0 %v1237, 64
    %v1239 = vpop.permute.xlu0 %1238
    %v1241 = vsel %vm186, %v1234, %v1239
    %v1242 = vpack.c.bf16 %v1241, %v1241
    %v1244 = vrot.slane %v1242, 1
    %v1246 = vsel %vm117, %v1244, 0
    %1248 = vmatprep.subr.bf16.mxu0 0
    %1249 = vmatpush1.bf16.msra.mxu0 %v445
    %1250 = vmatprep.subr.bf16.mxu0 0
    %1251 = vmatpush1.bf16.msra.mxu0 %v446
    %1252 = vmatprep.subr.bf16.mxu0 0
    %1253 = vmatpush1.bf16.msra.mxu0 %v447
    %1254 = vmatprep.subr.bf16.mxu0 0
    %1255 = vmatpush1.bf16.msra.mxu0 %v448
    %1256 = vmatprep.subr.bf16.mxu0 0
    %1257 = vmatpush1.bf16.msra.mxu0 0
    %1258 = vmatprep.subr.bf16.mxu0 0
    %1259 = vmatpush1.bf16.msra.mxu0 0
    %1260 = vmatprep.subr.bf16.mxu0 0
    %1261 = vmatpush1.bf16.msra.mxu0 0
    %1262 = vmatprep.subr.bf16.mxu0 0
    %1263 = vmatpush1.bf16.msra.mxu0 0
    %1264 = vmatprep.subr.bf16.mxu0 0
    %1265 = vmatpush1.bf16.msra.mxu0 0
    %1266 = vmatprep.subr.bf16.mxu0 0
    %1267 = vmatpush1.bf16.msra.mxu0 0
    %1268 = vmatprep.subr.bf16.mxu0 0
    %1269 = vmatpush1.bf16.msra.mxu0 0
    %1270 = vmatprep.subr.bf16.mxu0 0
    %1271 = vmatpush1.bf16.msra.mxu0 0
    %1272 = vmatprep.subr.bf16.mxu0 0
    %1273 = vmatpush1.bf16.msra.mxu0 0
    %1274 = vmatprep.subr.bf16.mxu0 0
    %1275 = vmatpush1.bf16.msra.mxu0 0
    %1276 = vmatprep.subr.bf16.mxu0 0
    %1277 = vmatpush1.bf16.msra.mxu0 0
    %1278 = vmatprep.subr.bf16.mxu0 0
    %1279 = vmatpush1.bf16.msra.mxu0 0
    %1280 = vmatprep.mubr.bf16.mxu0 0
    %1281 = vmatmul.mubr.bf16.gmra.mrb[0].mxu0 %v1246
    %v1282 = vpop.f32.mrb[0].mxu0
    %v1283 = vadd.f32 %v427, %v1282
    %v1284 = vpop.f32.mrb[0].mxu0
    %v1285 = vpop.f32.mrb[0].mxu0
    %v1286 = vpop.f32.mrb[0].mxu0
    %1287 = vdwg.mxu0
    %v1288 = vxor.u32 %v1283, 2147483648
    %v1289 = vmul.f32 %v1288, 1.442695
    %v1290 = vpow.pop %v1289
    %v1291 = vadd.f32 %v1290, 1.0
    %v1292 = vrcp.pop %v1291
    %v1293 = vmul.f32 1.0, %v1292
    %v1294 = vtanh.pop %v1283
    %v1295 = vmul.f32 %v1293, %v1146
    %1297 = vrot.lane.b32.xlu0 %v1294, 64
    %v1298 = vpop.permute.xlu0 %1297
    %v1300 = vmul.f32 %v1293, %v1298
    %1302 = vrot.lane.b32.xlu0 %v1300, 32
    %v1303 = vpop.permute.xlu0 %1302
    %v1305 = vadd.f32 %v1295, %v1303
    %v1306 = vtanh.pop %v1305
    %1308 = vrot.lane.b32.xlu0 %v1306, 64
    %v1309 = vpop.permute.xlu0 %1308
    %v1311 = vmul.f32 %v1293, %v1309
    %v1312 = vpack.c.bf16 %v1231, %v1231
    %v1314 = vrot.slane %v1312, 2
    %1315 = vrot.lane.b32.xlu0 %v1314, 32
    %v1316 = vpop.permute.xlu0 %1315
    %v1318 = vsel %vm186, %v1316, 0
    %1320 = vmatprep.subr.bf16.mxu0 0
    %1321 = vmatpush1.bf16.msra.mxu0 %v259
    %1322 = vmatprep.subr.bf16.mxu0 0
    %1323 = vmatpush1.bf16.msra.mxu0 %v260
    %1324 = vmatprep.subr.bf16.mxu0 0
    %1325 = vmatpush1.bf16.msra.mxu0 0
    %1326 = vmatprep.subr.bf16.mxu0 0
    %1327 = vmatpush1.bf16.msra.mxu0 0
    %1328 = vmatprep.subr.bf16.mxu0 0
    %1329 = vmatpush1.bf16.msra.mxu0 0
    %1330 = vmatprep.subr.bf16.mxu0 0
    %1331 = vmatpush1.bf16.msra.mxu0 0
    %1332 = vmatprep.subr.bf16.mxu0 0
    %1333 = vmatpush1.bf16.msra.mxu0 0
    %1334 = vmatprep.subr.bf16.mxu0 0
    %1335 = vmatpush1.bf16.msra.mxu0 0
    %1336 = vmatprep.subr.bf16.mxu0 0
    %1337 = vmatpush1.bf16.msra.mxu0 0
    %1338 = vmatprep.subr.bf16.mxu0 0
    %1339 = vmatpush1.bf16.msra.mxu0 0
    %1340 = vmatprep.subr.bf16.mxu0 0
    %1341 = vmatpush1.bf16.msra.mxu0 0
    %1342 = vmatprep.subr.bf16.mxu0 0
    %1343 = vmatpush1.bf16.msra.mxu0 0
    %1344 = vmatprep.subr.bf16.mxu0 0
    %1345 = vmatpush1.bf16.msra.mxu0 0
    %1346 = vmatprep.subr.bf16.mxu0 0
    %1347 = vmatpush1.bf16.msra.mxu0 0
    %1348 = vmatprep.subr.bf16.mxu0 0
    %1349 = vmatpush1.bf16.msra.mxu0 0
    %1350 = vmatprep.subr.bf16.mxu0 0
    %1351 = vmatpush1.bf16.msra.mxu0 0
    %1352 = vmatprep.mubr.bf16.mxu0 0
    %1353 = vmatmul.mubr.bf16.gmra.mrb[0].mxu0 %v1318
    %v1354 = vpop.f32.mrb[0].mxu0
    %v1355 = vadd.f32 0.0, %v1354
    %v1356 = vpop.f32.mrb[0].mxu0
    %v1357 = vpop.f32.mrb[0].mxu0
    %v1358 = vpop.f32.mrb[0].mxu0
    %1359 = vdwg.mxu0
    %v1361 = vrot.slane %v1355, 2
    %v1363 = vadd.f32 %v228, %v1361
    %v1364 = vxor.u32 %v1363, 2147483648
    %v1365 = vmul.f32 %v1364, 1.442695
    %v1366 = vpow.pop %v1365
    %v1367 = vadd.f32 %v1366, 1.0
    %v1368 = vrcp.pop %v1367
    %v1369 = vmul.f32 1.0, %v1368
    %v1370 = vtanh.pop %v1363
    %v1372 = vrot.slane %v1225, 6
    %v1374 = vmul.f32 %v1369, %v1372
    %1376 = vrot.lane.b32.xlu0 %v1370, 64
    %v1377 = vpop.permute.xlu0 %1376
    %v1379 = vmul.f32 %v1369, %v1377
    %1381 = vrot.lane.b32.xlu0 %v1379, 32
    %v1382 = vpop.permute.xlu0 %1381
    %v1384 = vadd.f32 %v1374, %v1382
    %v1385 = vtanh.pop %v1384
    %1387 = vrot.lane.b32.xlu0 %v1385, 64
    %v1388 = vpop.permute.xlu0 %1387
    %v1390 = vmul.f32 %v1369, %v1388
    %1392 = vrot.lane.b32.xlu0 %v1231, 32
    %v1393 = vpop.permute.xlu0 %1392
    %v1396 = vrot.slane %v1311, 4
    %1397 = vrot.lane.b32.xlu0 %v1396, 64
    %v1398 = vpop.permute.xlu0 %1397
    %v1400 = vsel %vm186, %v1393, %v1398
    %v1401 = vpack.c.bf16 %v1400, %v1400
    %v1403 = vrot.slane %v1401, 2
    %v1405 = vsel %vm117, %v1403, 0
    %1407 = vmatprep.subr.bf16.mxu0 0
    %1408 = vmatpush1.bf16.msra.mxu0 %v445
    %1409 = vmatprep.subr.bf16.mxu0 0
    %1410 = vmatpush1.bf16.msra.mxu0 %v446
    %1411 = vmatprep.subr.bf16.mxu0 0
    %1412 = vmatpush1.bf16.msra.mxu0 %v447
    %1413 = vmatprep.subr.bf16.mxu0 0
    %1414 = vmatpush1.bf16.msra.mxu0 %v448
    %1415 = vmatprep.subr.bf16.mxu0 0
    %1416 = vmatpush1.bf16.msra.mxu0 0
    %1417 = vmatprep.subr.bf16.mxu0 0
    %1418 = vmatpush1.bf16.msra.mxu0 0
    %1419 = vmatprep.subr.bf16.mxu0 0
    %1420 = vmatpush1.bf16.msra.mxu0 0
    %1421 = vmatprep.subr.bf16.mxu0 0
    %1422 = vmatpush1.bf16.msra.mxu0 0
    %1423 = vmatprep.subr.bf16.mxu0 0
    %1424 = vmatpush1.bf16.msra.mxu0 0
    %1425 = vmatprep.subr.bf16.mxu0 0
    %1426 = vmatpush1.bf16.msra.mxu0 0
    %1427 = vmatprep.subr.bf16.mxu0 0
    %1428 = vmatpush1.bf16.msra.mxu0 0
    %1429 = vmatprep.subr.bf16.mxu0 0
    %1430 = vmatpush1.bf16.msra.mxu0 0
    %1431 = vmatprep.subr.bf16.mxu0 0
    %1432 = vmatpush1.bf16.msra.mxu0 0
    %1433 = vmatprep.subr.bf16.mxu0 0
    %1434 = vmatpush1.bf16.msra.mxu0 0
    %1435 = vmatprep.subr.bf16.mxu0 0
    %1436 = vmatpush1.bf16.msra.mxu0 0
    %1437 = vmatprep.subr.bf16.mxu0 0
    %1438 = vmatpush1.bf16.msra.mxu0 0
    %1439 = vmatprep.mubr.bf16.mxu0 0
    %1440 = vmatmul.mubr.bf16.gmra.mrb[0].mxu0 %v1405
    %v1441 = vpop.f32.mrb[0].mxu0
    %v1442 = vadd.f32 %v427, %v1441
    %v1443 = vpop.f32.mrb[0].mxu0
    %v1444 = vpop.f32.mrb[0].mxu0
    %v1445 = vpop.f32.mrb[0].mxu0
    %1446 = vdwg.mxu0
    %v1447 = vxor.u32 %v1442, 2147483648
    %v1448 = vmul.f32 %v1447, 1.442695
    %v1449 = vpow.pop %v1448
    %v1450 = vadd.f32 %v1449, 1.0
    %v1451 = vrcp.pop %v1450
    %v1452 = vmul.f32 1.0, %v1451
    %v1453 = vtanh.pop %v1442
    %v1454 = vmul.f32 %v1452, %v1305
    %1456 = vrot.lane.b32.xlu0 %v1453, 64
    %v1457 = vpop.permute.xlu0 %1456
    %v1459 = vmul.f32 %v1452, %v1457
    %1461 = vrot.lane.b32.xlu0 %v1459, 32
    %v1462 = vpop.permute.xlu0 %1461
    %v1464 = vadd.f32 %v1454, %v1462
    %v1465 = vtanh.pop %v1464
    %1467 = vrot.lane.b32.xlu0 %v1465, 64
    %v1468 = vpop.permute.xlu0 %1467
    %v1470 = vmul.f32 %v1452, %v1468
    %1472 = vrot.lane.b32.xlu0 %v1390, 32
    %v1473 = vpop.permute.xlu0 %1472
    %v1476 = vrot.slane %v1470, 2
    %1477 = vrot.lane.b32.xlu0 %v1476, 64
    %v1478 = vpop.permute.xlu0 %1477
    %v1480 = vsel %vm186, %v1473, %v1478
    %v1481 = vpack.c.bf16 %v1480, %v1480
    %v1483 = vrot.slane %v1481, 3
    %v1485 = vsel %vm117, %v1483, 0
    %1487 = vmatprep.subr.bf16.mxu0 0
    %1488 = vmatpush1.bf16.msra.mxu0 %v445
    %1489 = vmatprep.subr.bf16.mxu0 0
    %1490 = vmatpush1.bf16.msra.mxu0 %v446
    %1491 = vmatprep.subr.bf16.mxu0 0
    %1492 = vmatpush1.bf16.msra.mxu0 %v447
    %1493 = vmatprep.subr.bf16.mxu0 0
    %1494 = vmatpush1.bf16.msra.mxu0 %v448
    %1495 = vmatprep.subr.bf16.mxu0 0
    %1496 = vmatpush1.bf16.msra.mxu0 0
    %1497 = vmatprep.subr.bf16.mxu0 0
    %1498 = vmatpush1.bf16.msra.mxu0 0
    %1499 = vmatprep.subr.bf16.mxu0 0
    %1500 = vmatpush1.bf16.msra.mxu0 0
    %1501 = vmatprep.subr.bf16.mxu0 0
    %1502 = vmatpush1.bf16.msra.mxu0 0
    %1503 = vmatprep.subr.bf16.mxu0 0
    %1504 = vmatpush1.bf16.msra.mxu0 0
    %1505 = vmatprep.subr.bf16.mxu0 0
    %1506 = vmatpush1.bf16.msra.mxu0 0
    %1507 = vmatprep.subr.bf16.mxu0 0
    %1508 = vmatpush1.bf16.msra.mxu0 0
    %1509 = vmatprep.subr.bf16.mxu0 0
    %1510 = vmatpush1.bf16.msra.mxu0 0
    %1511 = vmatprep.subr.bf16.mxu0 0
    %1512 = vmatpush1.bf16.msra.mxu0 0
    %1513 = vmatprep.subr.bf16.mxu0 0
    %1514 = vmatpush1.bf16.msra.mxu0 0
    %1515 = vmatprep.subr.bf16.mxu0 0
    %1516 = vmatpush1.bf16.msra.mxu0 0
    %1517 = vmatprep.subr.bf16.mxu0 0
    %1518 = vmatpush1.bf16.msra.mxu0 0
    %1519 = vmatprep.mubr.bf16.mxu0 0
    %1520 = vmatmul.mubr.bf16.gmra.mrb[0].mxu0 %v1485
    %v1521 = vpop.f32.mrb[0].mxu0
    %v1522 = vadd.f32 %v427, %v1521
    %v1523 = vpop.f32.mrb[0].mxu0
    %v1524 = vpop.f32.mrb[0].mxu0
    %v1525 = vpop.f32.mrb[0].mxu0
    %1526 = vdwg.mxu0
    %v1527 = vxor.u32 %v1522, 2147483648
    %v1528 = vmul.f32 %v1527, 1.442695
    %v1529 = vpow.pop %v1528
    %v1530 = vadd.f32 %v1529, 1.0
    %v1531 = vrcp.pop %v1530
    %v1532 = vmul.f32 1.0, %v1531
    %v1533 = vtanh.pop %v1522
    %v1534 = vmul.f32 %v1532, %v1464
    %1536 = vrot.lane.b32.xlu0 %v1533, 64
    %v1537 = vpop.permute.xlu0 %1536
    %v1539 = vmul.f32 %v1532, %v1537
    %1541 = vrot.lane.b32.xlu0 %v1539, 32
    %v1542 = vpop.permute.xlu0 %1541
    %v1544 = vadd.f32 %v1534, %v1542
    %v1545 = vtanh.pop %v1544
    %1547 = vrot.lane.b32.xlu0 %v1545, 64
    %v1548 = vpop.permute.xlu0 %1547
    %v1550 = vmul.f32 %v1532, %v1548
    %v1551 = vrot.slane %v682, 6
    %v1553 = vrot.slane %v841, 4
    %v1555 = vrot.slane %v997, 2
    %v1557 = vrot.slane %v1311, 6
    %v1559 = vrot.slane %v1470, 4
    %v1562 = vrot.slane %v1550, 2
    %vm1564 = vcmask 1041408
    %v1565 = vsel %vm1564, %v523, %v1551
    %vm1566 = vcmask 1043456
    %v1567 = vsel %vm1566, %v1565, %v1553
    %vm1568 = vcmask 1045504
    %v1569 = vsel %vm1568, %v1567, %v1555
    %v1570 = vsel %vm1564, %v1152, %v1557
    %v1571 = vsel %vm1566, %v1570, %v1559
    %v1572 = vsel %vm1568, %v1571, %v1562
    %v1573 = vpack.c.bf16 %v1572, %v1569
    %v1574 = vld [vmem:[%s9] sm:$0xf]
    %v1575 = vld [vmem:[%s9 + $0x4] sm:$0xf]
    %v1576 = vld [vmem:[%s9 + $0x8] sm:$0xf]
    %v1577 = vld [vmem:[%s9 + $0xc] sm:$0xf]
    %v1578 = vld [vmem:[%s10] sm:$0x1]
    %v1580 = vlaneseq
    %v1581 = vshrl.u32 %v1580, 7
    %v1582 = vsub.s32 0, %v1581
    %v1583 = vrot.slane %v1578, %v1582
    %1586 = vrot.lane.b32.xlu0 %v1573, 32
    %v1587 = vpop.permute.xlu0 %1586
    %v1592 = vunpack.c.l.b16 %v1574
    %v1593 = vunpack.c.l.b16 %v1575
    %v1594 = vunpack.c.l.b16 %v1576
    %v1595 = vunpack.c.l.b16 %v1577
    %v1596 = vpack.c.b16 %v1593, %v1592
    %v1597 = vpack.c.b16 %v1595, %v1594
    %v1601 = vsel %vm186, %v1587, 0
    %1603 = vmatprep.subr.bf16.mxu0 0
    %1604 = vmatpush1.bf16.msra.mxu0 %v1596
    %1605 = vmatprep.subr.bf16.mxu0 0
    %1606 = vmatpush1.bf16.msra.mxu0 %v1597
    %1607 = vmatprep.subr.bf16.mxu0 0
    %1608 = vmatpush1.bf16.msra.mxu0 0
    %1609 = vmatprep.subr.bf16.mxu0 0
    %1610 = vmatpush1.bf16.msra.mxu0 0
    %1611 = vmatprep.subr.bf16.mxu0 0
    %1612 = vmatpush1.bf16.msra.mxu0 0
    %1613 = vmatprep.subr.bf16.mxu0 0
    %1614 = vmatpush1.bf16.msra.mxu0 0
    %1615 = vmatprep.subr.bf16.mxu0 0
    %1616 = vmatpush1.bf16.msra.mxu0 0
    %1617 = vmatprep.subr.bf16.mxu0 0
    %1618 = vmatpush1.bf16.msra.mxu0 0
    %1619 = vmatprep.subr.bf16.mxu0 0
    %1620 = vmatpush1.bf16.msra.mxu0 0
    %1621 = vmatprep.subr.bf16.mxu0 0
    %1622 = vmatpush1.bf16.msra.mxu0 0
    %1623 = vmatprep.subr.bf16.mxu0 0
    %1624 = vmatpush1.bf16.msra.mxu0 0
    %1625 = vmatprep.subr.bf16.mxu0 0
    %1626 = vmatpush1.bf16.msra.mxu0 0
    %1627 = vmatprep.subr.bf16.mxu0 0
    %1628 = vmatpush1.bf16.msra.mxu0 0
    %1629 = vmatprep.subr.bf16.mxu0 0
    %1630 = vmatpush1.bf16.msra.mxu0 0
    %1631 = vmatprep.subr.bf16.mxu0 0
    %1632 = vmatpush1.bf16.msra.mxu0 0
    %1633 = vmatprep.subr.bf16.mxu0 0
    %1634 = vmatpush1.bf16.msra.mxu0 0
    %1635 = vmatprep.mubr.bf16.mxu0 0
    %1636 = vmatmul.mubr.bf16.gmra.mrb[0].mxu0 %v1601
    %v1637 = vpop.f32.mrb[0].mxu0
    %v1638 = vadd.f32 %v1583, %v1637
    %v1639 = vpop.f32.mrb[0].mxu0
    %v1640 = vpop.f32.mrb[0].mxu0
    %v1641 = vadd.f32 %v1583, %v1640
    %v1642 = vpop.f32.mrb[0].mxu0
    %1643 = vdwg.mxu0
    %1644 = vst [vmem:[#allocation7] sm:$0xff] %v1638
    %1645 = vst [vmem:[#allocation7 + $0x8] sm:$0xff] %v1641
    // Predicated region
    $region54: #{tpu_custom_call.1} parent=1 // pred_check
      _
    $region55: #{tpu_custom_call.1} parent=1 // pred_check_branch
      %1647 = sbr.rel (0) target = $region57
    $region56: #{tpu_custom_call.1} parent=1 // pred_region
      %s1649 = ssub.s32 256, 256
      %1650 = vsyncadd [#allocation4], %s1649
      %s1651 = sshll.u32 [#allocation7], 4
      %s1652 = int_to_ptr.vmem [resolvable:$true] %s1651
      %1657 = dma.vmem_to_hbm [thread:$0]  %s1652, 256, %s11, [#allocation4], 128, 128, 8
    $region57: #{tpu_custom_call.1} parent=1 // pred_fallthru
      _
    // Predicated region
    $region58: #{tpu_custom_call.1} parent=1 // pred_check
      _
    $region59: #{tpu_custom_call.1} parent=1 // pred_check_branch
      %1659 = sbr.rel (0) target = $region61
    $region60: #{tpu_custom_call.1} parent=1 // pred_region
      %1660 = dma.done [#allocation4], 256
    $region61: #{tpu_custom_call.1} parent=1 // pred_fallthru
      _
    %1661 = vsyncpa [#allocation3], 1
    %1662 = vsyncpa [#allocation6], 1
    %1663 = vsyncpa [#allocation4], 1

</llo_original>
